<compile_context>
chip_gen: v5e
topology: v5e:2x2
jax: 0.10.0
libtpu: 0.0.40
codegen_flags: <defaults>
</compile_context>

<pallas_src>
import math

import jax
import jax.numpy as jnp
import numpy as np
from jax.experimental import pallas as pl
from jax.experimental.pallas import tpu as pltpu

CH = 64            # conv channels
PACK = 4           # taps fused per MXU matmul in conv blocks 2/3 (contraction PACK*CH)
SEG = 24           # per-sample rows of each padded VMEM staging buffer
CONV_KS = (31, 11, 5)


def _num_groups(k):
    return -(-k // PACK)


# ---------------------------------------------------------------------------
# Fused kernel
# ---------------------------------------------------------------------------
def _make_fused_kernel(N, L0):
    """Build the fused forward kernel for batch N and input length L0."""
    L1 = L0 // 2          # after pool 1
    L2 = L1 // 2          # after pool 2
    L3 = L2 // 2          # after pool 3
    K2, K3 = CONV_KS[1], CONV_KS[2]
    P2, P3 = K2 // 2, K3 // 2
    G2, G3 = _num_groups(K2), _num_groups(K3)

    def kernel(x1_ref, w1_ref, b1_ref, w2_ref, b2_ref, w3_ref, b3_ref,
               f1w_ref, f1b_ref, f2w_ref, f2b_ref, f3w_ref, f3b_ref,
               o_ref, p1s, c2s, p2s, c3s, p3s):
        f32 = jnp.float32
        bf16 = jnp.bfloat16
        zrow8 = jnp.zeros((8, CH), f32)

        # ----- conv block 1: im2col'ed in wrapper -> one batched MXU matmul -----
        h1 = jnp.dot(x1_ref[...], w1_ref[...], preferred_element_type=f32)
        h1 = jnp.maximum(h1 + b1_ref[...], 0.0)                  # (N*L0, 64) f32

        def maxpool_3_2(stage, y_n, n, lin):
            """MaxPool1d(3, stride=2, padding=1) on one sample's post-ReLU rows.

            Data is staged at the sublane-aligned offset 8 of the per-sample region;
            only the single left pad row (row 7) needs zeroing (zero == -inf for
            post-ReLU data; the right pad is never read for even lin).
            """
            r0 = n * SEG
            stage[pl.ds(r0, 8), :] = zrow8                       # rows 0..7 (pad = row 7)
            if lin >= 8:
                stage[pl.ds(r0 + 8, lin), :] = y_n               # aligned store
            else:
                stage[pl.ds(r0 + 8, 8), :] = jnp.concatenate(
                    [y_n, jnp.zeros((8 - lin, CH), f32)], axis=0)
            lout = lin // 2
            a = stage[pl.ds(r0 + 7, lout, 2), :]                 # y[2j-1]
            b = stage[pl.ds(r0 + 8, lout, 2), :]                 # y[2j]
            c = stage[pl.ds(r0 + 9, lout, 2), :]                 # y[2j+1]
            return jnp.maximum(jnp.maximum(a, b), c)             # (lout, 64)

        def stage_for_conv(stage, pooled_n, n, lin):
            """Zero-pad one sample's pooled rows into a conv staging region."""
            r0 = n * SEG
            stage[pl.ds(r0, 8), :] = zrow8                       # left conv pad
            if lin >= 8:
                stage[pl.ds(r0 + 8, lin), :] = pooled_n
            else:
                stage[pl.ds(r0 + 8, 8), :] = jnp.concatenate(
                    [pooled_n, jnp.zeros((8 - lin, CH), f32)], axis=0)
            stage[pl.ds(r0 + 16, 8), :] = zrow8                  # right conv pad

        def conv_packed(stage, wg_ref, b_ref, lin, pad, groups):
            """'Same' Conv1d: PACK taps fused per matmul (contraction PACK*64),
            batch folded into the M dimension."""
            acc = jnp.zeros((N * lin, CH), f32)
            for g in range(groups):
                rows = []
                for n in range(N):
                    base = n * SEG + 8 - pad + PACK * g
                    taps = [stage[pl.ds(base + t, lin), :] for t in range(PACK)]
                    rows.append(jnp.concatenate(taps, axis=1))   # (lin, PACK*64)
                lhs = rows[0] if N == 1 else jnp.concatenate(rows, axis=0)
                acc = acc + jnp.dot(lhs.astype(bf16), wg_ref[g],
                                    preferred_element_type=f32)
            return jnp.maximum(acc + b_ref[...], 0.0)            # (N*lin, 64)

        # ----- pool 1 / conv block 2 -----
        for n in range(N):
            pooled1 = maxpool_3_2(p1s, h1[n * L0:(n + 1) * L0], n, L0)   # (L1, 64)
            stage_for_conv(c2s, pooled1, n, L1)
        h2 = conv_packed(c2s, w2_ref, b2_ref, L1, P2, G2)                # (N*L1, 64)

        # ----- pool 2 / conv block 3 -----
        for n in range(N):
            pooled2 = maxpool_3_2(p2s, h2[n * L1:(n + 1) * L1], n, L1)   # (L2, 64)
            stage_for_conv(c3s, pooled2, n, L2)
        h3 = conv_packed(c3s, w3_ref, b3_ref, L2, P3, G3)                # (N*L2, 64)

        # ----- pool 3 + flatten (NCW flatten folded into fc1's row order) -----
        feats = []
        for n in range(N):
            pooled3 = maxpool_3_2(p3s, h3[n * L2:(n + 1) * L2], n, L2)   # (L3, 64)
            feats.append(jnp.concatenate(
                [pooled3[l:l + 1, :] for l in range(L3)], axis=1))       # (1, L3*64)
        feat = feats[0] if N == 1 else jnp.concatenate(feats, axis=0)    # (N, L3*64)

        # ----- MLP head (Dropout = identity in eval mode) -----
        h = jnp.dot(feat.astype(bf16), f1w_ref[...], preferred_element_type=f32)
        h = jnp.maximum(h + f1b_ref[...], 0.0)
        h = jnp.dot(h.astype(bf16), f2w_ref[...], preferred_element_type=f32)
        h = jnp.maximum(h + f2b_ref[...], 0.0)
        o_ref[...] = jnp.dot(h.astype(bf16), f3w_ref[...],
                             preferred_element_type=f32) + f3b_ref[...]

    return kernel


# ---------------------------------------------------------------------------
# Wrapper (operand prep + single pallas_call)
# ---------------------------------------------------------------------------
def _full_spec(shape):
    nd = len(shape)
    return pl.BlockSpec(shape, lambda i, _nd=nd: (0,) * _nd)


def _prep_operands(x_ncw, params):
    """Layer-1 im2col, conv tap packing, fc1 flatten-permutation, bf16 casts."""
    N, Cin, L0 = x_ncw.shape
    (w1, b1), (w2, b2), (w3, b3) = params["conv"]
    K1 = w1.shape[0]
    pad1 = K1 // 2

    # Layer-1 im2col: row n*L0 + l, column k*Cin + c = x_padded[n, l + k, c].
    x_nlc = jnp.transpose(x_ncw.astype(jnp.float32), (0, 2, 1))      # (N, L0, Cin)
    x_pad = jnp.pad(x_nlc, ((0, 0), (pad1, pad1), (0, 0)))
    win = jnp.arange(L0)[:, None] + jnp.arange(K1)[None, :]          # (L0, K1)
    x_cols = x_pad[:, win, :].reshape(N * L0, K1 * Cin).astype(jnp.bfloat16)

    w1c = w1.reshape(K1 * Cin, CH).astype(jnp.bfloat16)

    def pack_taps(w):                                                # (K,64,64)->(G,256,64)
        K = w.shape[0]
        G = _num_groups(K)
        wp = jnp.pad(w, ((0, G * PACK - K), (0, 0), (0, 0)))
        return wp.reshape(G, PACK * CH, CH).astype(jnp.bfloat16)

    f1w, f1b = params["fc1"]
    f2w, f2b = params["fc2"]
    f3w, f3b = params["fc3"]
    L3 = L0 // 8
    H1 = f1w.shape[1]
    # Fold the PyTorch NCW flatten (index = c*L3 + l) into fc1's row order so the
    # kernel's natural [l-major | channel-minor] feature layout needs no transpose.
    f1wp = (f1w.reshape(CH, L3, H1).transpose(1, 0, 2)
            .reshape(L3 * CH, H1).astype(jnp.bfloat16))

    def b2d(b):
        return b.reshape(1, -1).astype(jnp.float32)

    return (x_cols, w1c, b2d(b1), pack_taps(w2), b2d(b2), pack_taps(w3), b2d(b3),
            f1wp, b2d(f1b), f2w.astype(jnp.bfloat16), b2d(f2b),
            f3w.astype(jnp.bfloat16), b2d(f3b))


@jax.jit
def furfaro_forward(x_ncw, params):
    N, _, L0 = x_ncw.shape
    assert L0 % 8 == 0 and 8 <= L0 <= 16, "staging buffers sized for input_size in {8,16}"
    n_classes = params["fc3"][0].shape[1]
    ops = _prep_operands(x_ncw, params)
    kernel = _make_fused_kernel(N, L0)
    return pl.pallas_call(
        kernel,
        out_shape=jax.ShapeDtypeStruct((N, n_classes), jnp.float32),
        grid_spec=pltpu.PrefetchScalarGridSpec(
            num_scalar_prefetch=0,
            grid=(1,),
            in_specs=[_full_spec(op.shape) for op in ops],
            out_specs=_full_spec((N, n_classes)),
            scratch_shapes=[pltpu.VMEM((N * SEG, CH), jnp.float32)] * 5,
        ),
        compiler_params=pltpu.CompilerParams(dimension_semantics=("arbitrary",)),
    )(*ops)


# ---------------------------------------------------------------------------
# Deterministic parameter init (synthetic; matches the module's __init__ shapes)
# ---------------------------------------------------------------------------
def init_params(key, in_channels, input_size, n_classes):
    ks = list(CONV_KS)
    keys = jax.random.split(key, 2 * len(ks) + 6)
    ki = 0
    convs = []
    cin = in_channels
    size = input_size
    for k in ks:
        fan_in = cin * k
        w = jax.random.normal(keys[ki], (k, cin, CH), jnp.float32) / math.sqrt(fan_in)
        ki += 1
        b = 0.01 * jax.random.normal(keys[ki], (CH,), jnp.float32)
        ki += 1
        convs.append((w, b))
        cin = CH
        size = math.ceil(size / 2)

    def lin(kw, kb, fin, fout):
        w = jax.random.normal(kw, (fin, fout), jnp.float32) / math.sqrt(fin)
        b = 0.01 * jax.random.normal(kb, (fout,), jnp.float32)
        return (w, b)

    F = size * CH
    fc1 = lin(keys[ki], keys[ki + 1], F, 500); ki += 2
    fc2 = lin(keys[ki], keys[ki + 1], 500, 100); ki += 2
    fc3 = lin(keys[ki], keys[ki + 1], 100, n_classes); ki += 2
    return {"conv": convs, "fc1": fc1, "fc2": fc2, "fc3": fc3}


# ---------------------------------------------------------------------------
# Pure-JAX reference (PyTorch NCW semantics, f32)
# ---------------------------------------------------------------------------
def reference_forward(x_ncw, params):
    x = x_ncw.astype(jnp.float32)
    for w, b in params["conv"]:
        K = w.shape[0]
        pad = K // 2
        w_oik = jnp.transpose(w, (2, 1, 0))  # (Cout, Cin, K)
        x = jax.lax.conv_general_dilated(
            x, w_oik, window_strides=(1,), padding=((pad, pad),),
            dimension_numbers=("NCH", "OIH", "NCH"))
        x = jnp.maximum(x + b[None, :, None], 0.0)
        x = jax.lax.reduce_window(
            x, jnp.array(-jnp.inf, x.dtype), jax.lax.max,
            window_dimensions=(1, 1, 3), window_strides=(1, 1, 2),
            padding=((0, 0), (0, 0), (1, 1)))
    feat = x.reshape(x.shape[0], -1)
    w1, b1 = params["fc1"]
    w2, b2 = params["fc2"]
    w3, b3 = params["fc3"]
    h = jnp.maximum(feat @ w1 + b1, 0.0)
    h = jnp.maximum(h @ w2 + b2, 0.0)
    return h @ w3 + b3


if __name__ == "__main__":
    # TODO(synk): Dropout is implemented as eval-mode identity (no train-mode RNG).
    in_channels, input_size, n_classes, batch = 4, 16, 3, 2

    key = jax.random.PRNGKey(0)
    kx, kp = jax.random.split(key)
    x = jax.random.normal(kx, (batch, in_channels, input_size), jnp.float32)
    params = init_params(kp, in_channels, input_size, n_classes)

    out = jax.block_until_ready(furfaro_forward(x, params))
    assert out.shape == (batch, n_classes), out.shape
    assert bool(jnp.all(jnp.isfinite(out)))

    ref = jax.block_until_ready(reference_forward(x, params))
    # bf16 MXU inputs with f32 accumulation -> small relative error vs f32 reference.
    np.testing.assert_allclose(np.asarray(out), np.asarray(ref), rtol=5e-2, atol=5e-2)

    print("KERNEL_OK")
</pallas_src>

<mosaic_0001>
module attributes {stable_mosaic.version = 11 : i64} {
  func.func @kernel(%arg0: i32, %arg1: memref<32x124xbf16, #tpu.memory_space<vmem>>, %arg2: memref<124x64xbf16, #tpu.memory_space<vmem>>, %arg3: memref<1x64xf32, #tpu.memory_space<vmem>>, %arg4: memref<3x256x64xbf16, #tpu.memory_space<vmem>>, %arg5: memref<1x64xf32, #tpu.memory_space<vmem>>, %arg6: memref<2x256x64xbf16, #tpu.memory_space<vmem>>, %arg7: memref<1x64xf32, #tpu.memory_space<vmem>>, %arg8: memref<128x500xbf16, #tpu.memory_space<vmem>>, %arg9: memref<1x500xf32, #tpu.memory_space<vmem>>, %arg10: memref<500x100xbf16, #tpu.memory_space<vmem>>, %arg11: memref<1x100xf32, #tpu.memory_space<vmem>>, %arg12: memref<100x3xbf16, #tpu.memory_space<vmem>>, %arg13: memref<1x3xf32, #tpu.memory_space<vmem>>, %arg14: memref<2x3xf32, #tpu.memory_space<vmem>>, %arg15: memref<48x64xf32, #tpu.memory_space<vmem>>, %arg16: memref<48x64xf32, #tpu.memory_space<vmem>>, %arg17: memref<48x64xf32, #tpu.memory_space<vmem>>, %arg18: memref<48x64xf32, #tpu.memory_space<vmem>>, %arg19: memref<48x64xf32, #tpu.memory_space<vmem>>) attributes {dimension_semantics = [#tpu.dimension_semantics<arbitrary>], iteration_bounds = array<i64: 1>, scalar_prefetch = 0 : i64, scratch_operands = 5 : i64, tpu.core_type = #tpu.core_type<tc>, window_params = [{pipeline_mode = #tpu.pipeline_mode<synchronous>, transform_indices = @transform_0, window_bounds = array<i64: 32, 124>}, {pipeline_mode = #tpu.pipeline_mode<synchronous>, transform_indices = @transform_1, window_bounds = array<i64: 124, 64>}, {pipeline_mode = #tpu.pipeline_mode<synchronous>, transform_indices = @transform_2, window_bounds = array<i64: 1, 64>}, {pipeline_mode = #tpu.pipeline_mode<synchronous>, transform_indices = @transform_3, window_bounds = array<i64: 3, 256, 64>}, {pipeline_mode = #tpu.pipeline_mode<synchronous>, transform_indices = @transform_4, window_bounds = array<i64: 1, 64>}, {pipeline_mode = #tpu.pipeline_mode<synchronous>, transform_indices = @transform_5, window_bounds = array<i64: 2, 256, 64>}, {pipeline_mode = #tpu.pipeline_mode<synchronous>, transform_indices = @transform_6, window_bounds = array<i64: 1, 64>}, {pipeline_mode = #tpu.pipeline_mode<synchronous>, transform_indices = @transform_7, window_bounds = array<i64: 128, 500>}, {pipeline_mode = #tpu.pipeline_mode<synchronous>, transform_indices = @transform_8, window_bounds = array<i64: 1, 500>}, {pipeline_mode = #tpu.pipeline_mode<synchronous>, transform_indices = @transform_9, window_bounds = array<i64: 500, 100>}, {pipeline_mode = #tpu.pipeline_mode<synchronous>, transform_indices = @transform_10, window_bounds = array<i64: 1, 100>}, {pipeline_mode = #tpu.pipeline_mode<synchronous>, transform_indices = @transform_11, window_bounds = array<i64: 100, 3>}, {pipeline_mode = #tpu.pipeline_mode<synchronous>, transform_indices = @transform_12, window_bounds = array<i64: 1, 3>}, {pipeline_mode = #tpu.pipeline_mode<synchronous>, transform_indices = @transform_13, window_bounds = array<i64: 2, 3>}]} {
    %cst = arith.constant 0.000000e+00 : f32
    %0 = vector.broadcast %cst : f32 to vector<8x64xf32>
    %c0 = arith.constant 0 : index
    %c0_0 = arith.constant 0 : index
    %1 = vector.load %arg1[%c0, %c0_0] : memref<32x124xbf16, #tpu.memory_space<vmem>>, vector<32x124xbf16>
    %c0_1 = arith.constant 0 : index
    %c0_2 = arith.constant 0 : index
    %2 = vector.load %arg2[%c0_1, %c0_2] : memref<124x64xbf16, #tpu.memory_space<vmem>>, vector<124x64xbf16>
    %cst_3 = arith.constant dense<0.000000e+00> : vector<32x64xf32>
    %3 = tpu.matmul %1, %2, %cst_3 {dimension_numbers = #tpu.dot_dimension_numbers<[1], [0], [0], [1], [0, 0, 1, 1], [], []>} : vector<32x124xbf16>, vector<124x64xbf16>, vector<32x64xf32> -> vector<32x64xf32>
    %c0_4 = arith.constant 0 : index
    %c0_5 = arith.constant 0 : index
    %4 = vector.load %arg3[%c0_4, %c0_5] : memref<1x64xf32, #tpu.memory_space<vmem>>, vector<1x64xf32>
    %5 = vector.broadcast %4 : vector<1x64xf32> to vector<32x64xf32>
    %6 = arith.addf %3, %5 : vector<32x64xf32>
    %cst_6 = arith.constant 0.000000e+00 : f32
    %7 = vector.broadcast %cst_6 : f32 to vector<32x64xf32>
    %8 = arith.maximumf %6, %7 : vector<32x64xf32>
    %9 = vector.extract_strided_slice %8 {offsets = [0, 0], sizes = [16, 64], strides = [1, 1]} : vector<32x64xf32> to vector<16x64xf32>
    %c0_7 = arith.constant 0 : index
    %c0_8 = arith.constant 0 : index
    %10 = vector.load %arg15[%c0_7, %c0_8] : memref<48x64xf32, #tpu.memory_space<vmem>>, vector<8x64xf32>
    tpu.vector_store %arg15[%c0_7, %c0_8], %0 {strides = array<i32>} : memref<48x64xf32, #tpu.memory_space<vmem>>, vector<8x64xf32>,
    %c8 = arith.constant 8 : index
    %c0_9 = arith.constant 0 : index
    %11 = vector.load %arg15[%c8, %c0_9] : memref<48x64xf32, #tpu.memory_space<vmem>>, vector<16x64xf32>
    tpu.vector_store %arg15[%c8, %c0_9], %9 {strides = array<i32>} : memref<48x64xf32, #tpu.memory_space<vmem>>, vector<16x64xf32>,
    %c7 = arith.constant 7 : index
    %c0_10 = arith.constant 0 : index
    %12 = tpu.strided_load %arg15[%c7, %c0_10] {strides = array<i32: 2, 1>} : memref<48x64xf32, #tpu.memory_space<vmem>>, vector<8x64xf32>
    %c8_11 = arith.constant 8 : index
    %c0_12 = arith.constant 0 : index
    %13 = tpu.strided_load %arg15[%c8_11, %c0_12] {strides = array<i32: 2, 1>} : memref<48x64xf32, #tpu.memory_space<vmem>>, vector<8x64xf32>
    %c9 = arith.constant 9 : index
    %c0_13 = arith.constant 0 : index
    %14 = tpu.strided_load %arg15[%c9, %c0_13] {strides = array<i32: 2, 1>} : memref<48x64xf32, #tpu.memory_space<vmem>>, vector<8x64xf32>
    %15 = arith.maximumf %12, %13 : vector<8x64xf32>
    %16 = arith.maximumf %15, %14 : vector<8x64xf32>
    %c0_14 = arith.constant 0 : index
    %c0_15 = arith.constant 0 : index
    %17 = vector.load %arg16[%c0_14, %c0_15] : memref<48x64xf32, #tpu.memory_space<vmem>>, vector<8x64xf32>
    tpu.vector_store %arg16[%c0_14, %c0_15], %0 {strides = array<i32>} : memref<48x64xf32, #tpu.memory_space<vmem>>, vector<8x64xf32>,
    %c8_16 = arith.constant 8 : index
    %c0_17 = arith.constant 0 : index
    %18 = vector.load %arg16[%c8_16, %c0_17] : memref<48x64xf32, #tpu.memory_space<vmem>>, vector<8x64xf32>
    tpu.vector_store %arg16[%c8_16, %c0_17], %16 {strides = array<i32>} : memref<48x64xf32, #tpu.memory_space<vmem>>, vector<8x64xf32>,
    %c16 = arith.constant 16 : index
    %c0_18 = arith.constant 0 : index
    %19 = vector.load %arg16[%c16, %c0_18] : memref<48x64xf32, #tpu.memory_space<vmem>>, vector<8x64xf32>
    tpu.vector_store %arg16[%c16, %c0_18], %0 {strides = array<i32>} : memref<48x64xf32, #tpu.memory_space<vmem>>, vector<8x64xf32>,
    %20 = vector.extract_strided_slice %8 {offsets = [16, 0], sizes = [16, 64], strides = [1, 1]} : vector<32x64xf32> to vector<16x64xf32>
    %c24 = arith.constant 24 : index
    %c0_19 = arith.constant 0 : index
    %21 = vector.load %arg15[%c24, %c0_19] : memref<48x64xf32, #tpu.memory_space<vmem>>, vector<8x64xf32>
    tpu.vector_store %arg15[%c24, %c0_19], %0 {strides = array<i32>} : memref<48x64xf32, #tpu.memory_space<vmem>>, vector<8x64xf32>,
    %c32 = arith.constant 32 : index
    %c0_20 = arith.constant 0 : index
    %22 = vector.load %arg15[%c32, %c0_20] : memref<48x64xf32, #tpu.memory_space<vmem>>, vector<16x64xf32>
    tpu.vector_store %arg15[%c32, %c0_20], %20 {strides = array<i32>} : memref<48x64xf32, #tpu.memory_space<vmem>>, vector<16x64xf32>,
    %c31 = arith.constant 31 : index
    %c0_21 = arith.constant 0 : index
    %23 = tpu.strided_load %arg15[%c31, %c0_21] {strides = array<i32: 2, 1>} : memref<48x64xf32, #tpu.memory_space<vmem>>, vector<8x64xf32>
    %c32_22 = arith.constant 32 : index
    %c0_23 = arith.constant 0 : index
    %24 = tpu.strided_load %arg15[%c32_22, %c0_23] {strides = array<i32: 2, 1>} : memref<48x64xf32, #tpu.memory_space<vmem>>, vector<8x64xf32>
    %c33 = arith.constant 33 : index
    %c0_24 = arith.constant 0 : index
    %25 = tpu.strided_load %arg15[%c33, %c0_24] {strides = array<i32: 2, 1>} : memref<48x64xf32, #tpu.memory_space<vmem>>, vector<8x64xf32>
    %26 = arith.maximumf %23, %24 : vector<8x64xf32>
    %27 = arith.maximumf %26, %25 : vector<8x64xf32>
    %c24_25 = arith.constant 24 : index
    %c0_26 = arith.constant 0 : index
    %28 = vector.load %arg16[%c24_25, %c0_26] : memref<48x64xf32, #tpu.memory_space<vmem>>, vector<8x64xf32>
    tpu.vector_store %arg16[%c24_25, %c0_26], %0 {strides = array<i32>} : memref<48x64xf32, #tpu.memory_space<vmem>>, vector<8x64xf32>,
    %c32_27 = arith.constant 32 : index
    %c0_28 = arith.constant 0 : index
    %29 = vector.load %arg16[%c32_27, %c0_28] : memref<48x64xf32, #tpu.memory_space<vmem>>, vector<8x64xf32>
    tpu.vector_store %arg16[%c32_27, %c0_28], %27 {strides = array<i32>} : memref<48x64xf32, #tpu.memory_space<vmem>>, vector<8x64xf32>,
    %c40 = arith.constant 40 : index
    %c0_29 = arith.constant 0 : index
    %30 = vector.load %arg16[%c40, %c0_29] : memref<48x64xf32, #tpu.memory_space<vmem>>, vector<8x64xf32>
    tpu.vector_store %arg16[%c40, %c0_29], %0 {strides = array<i32>} : memref<48x64xf32, #tpu.memory_space<vmem>>, vector<8x64xf32>,
    %cst_30 = arith.constant 0.000000e+00 : f32
    %31 = vector.broadcast %cst_30 : f32 to vector<16x64xf32>
    %c3 = arith.constant 3 : index
    %c0_31 = arith.constant 0 : index
    %32 = vector.load %arg16[%c3, %c0_31] : memref<48x64xf32, #tpu.memory_space<vmem>>, vector<8x64xf32>
    %c4 = arith.constant 4 : index
    %c0_32 = arith.constant 0 : index
    %33 = vector.load %arg16[%c4, %c0_32] : memref<48x64xf32, #tpu.memory_space<vmem>>, vector<8x64xf32>
    %c5 = arith.constant 5 : index
    %c0_33 = arith.constant 0 : index
    %34 = vector.load %arg16[%c5, %c0_33] : memref<48x64xf32, #tpu.memory_space<vmem>>, vector<8x64xf32>
    %c6 = arith.constant 6 : index
    %c0_34 = arith.constant 0 : index
    %35 = vector.load %arg16[%c6, %c0_34] : memref<48x64xf32, #tpu.memory_space<vmem>>, vector<8x64xf32>
    %36 = tpu.concatenate %32, %33, %34, %35 in 1 : vector<8x64xf32>, vector<8x64xf32>, vector<8x64xf32>, vector<8x64xf32> -> vector<8x256xf32>
    %c27 = arith.constant 27 : index
    %c0_35 = arith.constant 0 : index
    %37 = vector.load %arg16[%c27, %c0_35] : memref<48x64xf32, #tpu.memory_space<vmem>>, vector<8x64xf32>
    %c28 = arith.constant 28 : index
    %c0_36 = arith.constant 0 : index
    %38 = vector.load %arg16[%c28, %c0_36] : memref<48x64xf32, #tpu.memory_space<vmem>>, vector<8x64xf32>
    %c29 = arith.constant 29 : index
    %c0_37 = arith.constant 0 : index
    %39 = vector.load %arg16[%c29, %c0_37] : memref<48x64xf32, #tpu.memory_space<vmem>>, vector<8x64xf32>
    %c30 = arith.constant 30 : index
    %c0_38 = arith.constant 0 : index
    %40 = vector.load %arg16[%c30, %c0_38] : memref<48x64xf32, #tpu.memory_space<vmem>>, vector<8x64xf32>
    %41 = tpu.concatenate %37, %38, %39, %40 in 1 : vector<8x64xf32>, vector<8x64xf32>, vector<8x64xf32>, vector<8x64xf32> -> vector<8x256xf32>
    %42 = tpu.concatenate %36, %41 in 0 : vector<8x256xf32>, vector<8x256xf32> -> vector<16x256xf32>
    %43 = arith.truncf %42 : vector<16x256xf32> to vector<16x256xbf16>
    %c0_39 = arith.constant 0 : index
    %c0_40 = arith.constant 0 : index
    %c0_41 = arith.constant 0 : index
    %44 = vector.load %arg4[%c0_39, %c0_40, %c0_41] : memref<3x256x64xbf16, #tpu.memory_space<vmem>>, vector<1x256x64xbf16>
    %45 = vector.shape_cast %44 : vector<1x256x64xbf16> to vector<256x64xbf16>
    %cst_42 = arith.constant dense<0.000000e+00> : vector<16x64xf32>
    %46 = tpu.matmul %43, %45, %cst_42 {dimension_numbers = #tpu.dot_dimension_numbers<[1], [0], [0], [1], [0, 0, 1, 1], [], []>} : vector<16x256xbf16>, vector<256x64xbf16>, vector<16x64xf32> -> vector<16x64xf32>
    %47 = arith.addf %31, %46 : vector<16x64xf32>
    %c7_43 = arith.constant 7 : index
    %c0_44 = arith.constant 0 : index
    %48 = vector.load %arg16[%c7_43, %c0_44] : memref<48x64xf32, #tpu.memory_space<vmem>>, vector<8x64xf32>
    %c8_45 = arith.constant 8 : index
    %c0_46 = arith.constant 0 : index
    %49 = vector.load %arg16[%c8_45, %c0_46] : memref<48x64xf32, #tpu.memory_space<vmem>>, vector<8x64xf32>
    %c9_47 = arith.constant 9 : index
    %c0_48 = arith.constant 0 : index
    %50 = vector.load %arg16[%c9_47, %c0_48] : memref<48x64xf32, #tpu.memory_space<vmem>>, vector<8x64xf32>
    %c10 = arith.constant 10 : index
    %c0_49 = arith.constant 0 : index
    %51 = vector.load %arg16[%c10, %c0_49] : memref<48x64xf32, #tpu.memory_space<vmem>>, vector<8x64xf32>
    %52 = tpu.concatenate %48, %49, %50, %51 in 1 : vector<8x64xf32>, vector<8x64xf32>, vector<8x64xf32>, vector<8x64xf32> -> vector<8x256xf32>
    %c31_50 = arith.constant 31 : index
    %c0_51 = arith.constant 0 : index
    %53 = vector.load %arg16[%c31_50, %c0_51] : memref<48x64xf32, #tpu.memory_space<vmem>>, vector<8x64xf32>
    %c32_52 = arith.constant 32 : index
    %c0_53 = arith.constant 0 : index
    %54 = vector.load %arg16[%c32_52, %c0_53] : memref<48x64xf32, #tpu.memory_space<vmem>>, vector<8x64xf32>
    %c33_54 = arith.constant 33 : index
    %c0_55 = arith.constant 0 : index
    %55 = vector.load %arg16[%c33_54, %c0_55] : memref<48x64xf32, #tpu.memory_space<vmem>>, vector<8x64xf32>
    %c34 = arith.constant 34 : index
    %c0_56 = arith.constant 0 : index
    %56 = vector.load %arg16[%c34, %c0_56] : memref<48x64xf32, #tpu.memory_space<vmem>>, vector<8x64xf32>
    %57 = tpu.concatenate %53, %54, %55, %56 in 1 : vector<8x64xf32>, vector<8x64xf32>, vector<8x64xf32>, vector<8x64xf32> -> vector<8x256xf32>
    %58 = tpu.concatenate %52, %57 in 0 : vector<8x256xf32>, vector<8x256xf32> -> vector<16x256xf32>
    %59 = arith.truncf %58 : vector<16x256xf32> to vector<16x256xbf16>
    %c1 = arith.constant 1 : index
    %c0_57 = arith.constant 0 : index
    %c0_58 = arith.constant 0 : index
    %60 = vector.load %arg4[%c1, %c0_57, %c0_58] : memref<3x256x64xbf16, #tpu.memory_space<vmem>>, vector<1x256x64xbf16>
    %61 = vector.shape_cast %60 : vector<1x256x64xbf16> to vector<256x64xbf16>
    %cst_59 = arith.constant dense<0.000000e+00> : vector<16x64xf32>
    %62 = tpu.matmul %59, %61, %cst_59 {dimension_numbers = #tpu.dot_dimension_numbers<[1], [0], [0], [1], [0, 0, 1, 1], [], []>} : vector<16x256xbf16>, vector<256x64xbf16>, vector<16x64xf32> -> vector<16x64xf32>
    %63 = arith.addf %47, %62 : vector<16x64xf32>
    %c11 = arith.constant 11 : index
    %c0_60 = arith.constant 0 : index
    %64 = vector.load %arg16[%c11, %c0_60] : memref<48x64xf32, #tpu.memory_space<vmem>>, vector<8x64xf32>
    %c12 = arith.constant 12 : index
    %c0_61 = arith.constant 0 : index
    %65 = vector.load %arg16[%c12, %c0_61] : memref<48x64xf32, #tpu.memory_space<vmem>>, vector<8x64xf32>
    %c13 = arith.constant 13 : index
    %c0_62 = arith.constant 0 : index
    %66 = vector.load %arg16[%c13, %c0_62] : memref<48x64xf32, #tpu.memory_space<vmem>>, vector<8x64xf32>
    %c14 = arith.constant 14 : index
    %c0_63 = arith.constant 0 : index
    %67 = vector.load %arg16[%c14, %c0_63] : memref<48x64xf32, #tpu.memory_space<vmem>>, vector<8x64xf32>
    %68 = tpu.concatenate %64, %65, %66, %67 in 1 : vector<8x64xf32>, vector<8x64xf32>, vector<8x64xf32>, vector<8x64xf32> -> vector<8x256xf32>
    %c35 = arith.constant 35 : index
    %c0_64 = arith.constant 0 : index
    %69 = vector.load %arg16[%c35, %c0_64] : memref<48x64xf32, #tpu.memory_space<vmem>>, vector<8x64xf32>
    %c36 = arith.constant 36 : index
    %c0_65 = arith.constant 0 : index
    %70 = vector.load %arg16[%c36, %c0_65] : memref<48x64xf32, #tpu.memory_space<vmem>>, vector<8x64xf32>
    %c37 = arith.constant 37 : index
    %c0_66 = arith.constant 0 : index
    %71 = vector.load %arg16[%c37, %c0_66] : memref<48x64xf32, #tpu.memory_space<vmem>>, vector<8x64xf32>
    %c38 = arith.constant 38 : index
    %c0_67 = arith.constant 0 : index
    %72 = vector.load %arg16[%c38, %c0_67] : memref<48x64xf32, #tpu.memory_space<vmem>>, vector<8x64xf32>
    %73 = tpu.concatenate %69, %70, %71, %72 in 1 : vector<8x64xf32>, vector<8x64xf32>, vector<8x64xf32>, vector<8x64xf32> -> vector<8x256xf32>
    %74 = tpu.concatenate %68, %73 in 0 : vector<8x256xf32>, vector<8x256xf32> -> vector<16x256xf32>
    %75 = arith.truncf %74 : vector<16x256xf32> to vector<16x256xbf16>
    %c2 = arith.constant 2 : index
    %c0_68 = arith.constant 0 : index
    %c0_69 = arith.constant 0 : index
    %76 = vector.load %arg4[%c2, %c0_68, %c0_69] : memref<3x256x64xbf16, #tpu.memory_space<vmem>>, vector<1x256x64xbf16>
    %77 = vector.shape_cast %76 : vector<1x256x64xbf16> to vector<256x64xbf16>
    %cst_70 = arith.constant dense<0.000000e+00> : vector<16x64xf32>
    %78 = tpu.matmul %75, %77, %cst_70 {dimension_numbers = #tpu.dot_dimension_numbers<[1], [0], [0], [1], [0, 0, 1, 1], [], []>} : vector<16x256xbf16>, vector<256x64xbf16>, vector<16x64xf32> -> vector<16x64xf32>
    %79 = arith.addf %63, %78 : vector<16x64xf32>
    %c0_71 = arith.constant 0 : index
    %c0_72 = arith.constant 0 : index
    %80 = vector.load %arg5[%c0_71, %c0_72] : memref<1x64xf32, #tpu.memory_space<vmem>>, vector<1x64xf32>
    %81 = vector.broadcast %80 : vector<1x64xf32> to vector<16x64xf32>
    %82 = arith.addf %79, %81 : vector<16x64xf32>
    %cst_73 = arith.constant 0.000000e+00 : f32
    %83 = vector.broadcast %cst_73 : f32 to vector<16x64xf32>
    %84 = arith.maximumf %82, %83 : vector<16x64xf32>
    %85 = vector.extract_strided_slice %84 {offsets = [0, 0], sizes = [8, 64], strides = [1, 1]} : vector<16x64xf32> to vector<8x64xf32>
    %c0_74 = arith.constant 0 : index
    %c0_75 = arith.constant 0 : index
    %86 = vector.load %arg17[%c0_74, %c0_75] : memref<48x64xf32, #tpu.memory_space<vmem>>, vector<8x64xf32>
    tpu.vector_store %arg17[%c0_74, %c0_75], %0 {strides = array<i32>} : memref<48x64xf32, #tpu.memory_space<vmem>>, vector<8x64xf32>,
    %c8_76 = arith.constant 8 : index
    %c0_77 = arith.constant 0 : index
    %87 = vector.load %arg17[%c8_76, %c0_77] : memref<48x64xf32, #tpu.memory_space<vmem>>, vector<8x64xf32>
    tpu.vector_store %arg17[%c8_76, %c0_77], %85 {strides = array<i32>} : memref<48x64xf32, #tpu.memory_space<vmem>>, vector<8x64xf32>,
    %c7_78 = arith.constant 7 : index
    %c0_79 = arith.constant 0 : index
    %88 = tpu.strided_load %arg17[%c7_78, %c0_79] {strides = array<i32: 2, 1>} : memref<48x64xf32, #tpu.memory_space<vmem>>, vector<4x64xf32>
    %c8_80 = arith.constant 8 : index
    %c0_81 = arith.constant 0 : index
    %89 = tpu.strided_load %arg17[%c8_80, %c0_81] {strides = array<i32: 2, 1>} : memref<48x64xf32, #tpu.memory_space<vmem>>, vector<4x64xf32>
    %c9_82 = arith.constant 9 : index
    %c0_83 = arith.constant 0 : index
    %90 = tpu.strided_load %arg17[%c9_82, %c0_83] {strides = array<i32: 2, 1>} : memref<48x64xf32, #tpu.memory_space<vmem>>, vector<4x64xf32>
    %91 = arith.maximumf %88, %89 : vector<4x64xf32>
    %92 = arith.maximumf %91, %90 : vector<4x64xf32>
    %c0_84 = arith.constant 0 : index
    %c0_85 = arith.constant 0 : index
    %93 = vector.load %arg18[%c0_84, %c0_85] : memref<48x64xf32, #tpu.memory_space<vmem>>, vector<8x64xf32>
    tpu.vector_store %arg18[%c0_84, %c0_85], %0 {strides = array<i32>} : memref<48x64xf32, #tpu.memory_space<vmem>>, vector<8x64xf32>,
    %cst_86 = arith.constant 0.000000e+00 : f32
    %94 = vector.broadcast %cst_86 : f32 to vector<4x64xf32>
    %95 = tpu.concatenate %92, %94 in 0 : vector<4x64xf32>, vector<4x64xf32> -> vector<8x64xf32>
    %c8_87 = arith.constant 8 : index
    %c0_88 = arith.constant 0 : index
    %96 = vector.load %arg18[%c8_87, %c0_88] : memref<48x64xf32, #tpu.memory_space<vmem>>, vector<8x64xf32>
    tpu.vector_store %arg18[%c8_87, %c0_88], %95 {strides = array<i32>} : memref<48x64xf32, #tpu.memory_space<vmem>>, vector<8x64xf32>,
    %c16_89 = arith.constant 16 : index
    %c0_90 = arith.constant 0 : index
    %97 = vector.load %arg18[%c16_89, %c0_90] : memref<48x64xf32, #tpu.memory_space<vmem>>, vector<8x64xf32>
    tpu.vector_store %arg18[%c16_89, %c0_90], %0 {strides = array<i32>} : memref<48x64xf32, #tpu.memory_space<vmem>>, vector<8x64xf32>,
    %98 = vector.extract_strided_slice %84 {offsets = [8, 0], sizes = [8, 64], strides = [1, 1]} : vector<16x64xf32> to vector<8x64xf32>
    %c24_91 = arith.constant 24 : index
    %c0_92 = arith.constant 0 : index
    %99 = vector.load %arg17[%c24_91, %c0_92] : memref<48x64xf32, #tpu.memory_space<vmem>>, vector<8x64xf32>
    tpu.vector_store %arg17[%c24_91, %c0_92], %0 {strides = array<i32>} : memref<48x64xf32, #tpu.memory_space<vmem>>, vector<8x64xf32>,
    %c32_93 = arith.constant 32 : index
    %c0_94 = arith.constant 0 : index
    %100 = vector.load %arg17[%c32_93, %c0_94] : memref<48x64xf32, #tpu.memory_space<vmem>>, vector<8x64xf32>
    tpu.vector_store %arg17[%c32_93, %c0_94], %98 {strides = array<i32>} : memref<48x64xf32, #tpu.memory_space<vmem>>, vector<8x64xf32>,
    %c31_95 = arith.constant 31 : index
    %c0_96 = arith.constant 0 : index
    %101 = tpu.strided_load %arg17[%c31_95, %c0_96] {strides = array<i32: 2, 1>} : memref<48x64xf32, #tpu.memory_space<vmem>>, vector<4x64xf32>
    %c32_97 = arith.constant 32 : index
    %c0_98 = arith.constant 0 : index
    %102 = tpu.strided_load %arg17[%c32_97, %c0_98] {strides = array<i32: 2, 1>} : memref<48x64xf32, #tpu.memory_space<vmem>>, vector<4x64xf32>
    %c33_99 = arith.constant 33 : index
    %c0_100 = arith.constant 0 : index
    %103 = tpu.strided_load %arg17[%c33_99, %c0_100] {strides = array<i32: 2, 1>} : memref<48x64xf32, #tpu.memory_space<vmem>>, vector<4x64xf32>
    %104 = arith.maximumf %101, %102 : vector<4x64xf32>
    %105 = arith.maximumf %104, %103 : vector<4x64xf32>
    %c24_101 = arith.constant 24 : index
    %c0_102 = arith.constant 0 : index
    %106 = vector.load %arg18[%c24_101, %c0_102] : memref<48x64xf32, #tpu.memory_space<vmem>>, vector<8x64xf32>
    tpu.vector_store %arg18[%c24_101, %c0_102], %0 {strides = array<i32>} : memref<48x64xf32, #tpu.memory_space<vmem>>, vector<8x64xf32>,
    %cst_103 = arith.constant 0.000000e+00 : f32
    %107 = vector.broadcast %cst_103 : f32 to vector<4x64xf32>
    %108 = tpu.concatenate %105, %107 in 0 : vector<4x64xf32>, vector<4x64xf32> -> vector<8x64xf32>
    %c32_104 = arith.constant 32 : index
    %c0_105 = arith.constant 0 : index
    %109 = vector.load %arg18[%c32_104, %c0_105] : memref<48x64xf32, #tpu.memory_space<vmem>>, vector<8x64xf32>
    tpu.vector_store %arg18[%c32_104, %c0_105], %108 {strides = array<i32>} : memref<48x64xf32, #tpu.memory_space<vmem>>, vector<8x64xf32>,
    %c40_106 = arith.constant 40 : index
    %c0_107 = arith.constant 0 : index
    %110 = vector.load %arg18[%c40_106, %c0_107] : memref<48x64xf32, #tpu.memory_space<vmem>>, vector<8x64xf32>
    tpu.vector_store %arg18[%c40_106, %c0_107], %0 {strides = array<i32>} : memref<48x64xf32, #tpu.memory_space<vmem>>, vector<8x64xf32>,
    %cst_108 = arith.constant 0.000000e+00 : f32
    %111 = vector.broadcast %cst_108 : f32 to vector<8x64xf32>
    %c6_109 = arith.constant 6 : index
    %c0_110 = arith.constant 0 : index
    %112 = vector.load %arg18[%c6_109, %c0_110] : memref<48x64xf32, #tpu.memory_space<vmem>>, vector<4x64xf32>
    %c7_111 = arith.constant 7 : index
    %c0_112 = arith.constant 0 : index
    %113 = vector.load %arg18[%c7_111, %c0_112] : memref<48x64xf32, #tpu.memory_space<vmem>>, vector<4x64xf32>
    %c8_113 = arith.constant 8 : index
    %c0_114 = arith.constant 0 : index
    %114 = vector.load %arg18[%c8_113, %c0_114] : memref<48x64xf32, #tpu.memory_space<vmem>>, vector<4x64xf32>
    %c9_115 = arith.constant 9 : index
    %c0_116 = arith.constant 0 : index
    %115 = vector.load %arg18[%c9_115, %c0_116] : memref<48x64xf32, #tpu.memory_space<vmem>>, vector<4x64xf32>
    %116 = tpu.concatenate %112, %113, %114, %115 in 1 : vector<4x64xf32>, vector<4x64xf32>, vector<4x64xf32>, vector<4x64xf32> -> vector<4x256xf32>
    %c30_117 = arith.constant 30 : index
    %c0_118 = arith.constant 0 : index
    %117 = vector.load %arg18[%c30_117, %c0_118] : memref<48x64xf32, #tpu.memory_space<vmem>>, vector<4x64xf32>
    %c31_119 = arith.constant 31 : index
    %c0_120 = arith.constant 0 : index
    %118 = vector.load %arg18[%c31_119, %c0_120] : memref<48x64xf32, #tpu.memory_space<vmem>>, vector<4x64xf32>
    %c32_121 = arith.constant 32 : index
    %c0_122 = arith.constant 0 : index
    %119 = vector.load %arg18[%c32_121, %c0_122] : memref<48x64xf32, #tpu.memory_space<vmem>>, vector<4x64xf32>
    %c33_123 = arith.constant 33 : index
    %c0_124 = arith.constant 0 : index
    %120 = vector.load %arg18[%c33_123, %c0_124] : memref<48x64xf32, #tpu.memory_space<vmem>>, vector<4x64xf32>
    %121 = tpu.concatenate %117, %118, %119, %120 in 1 : vector<4x64xf32>, vector<4x64xf32>, vector<4x64xf32>, vector<4x64xf32> -> vector<4x256xf32>
    %122 = tpu.concatenate %116, %121 in 0 : vector<4x256xf32>, vector<4x256xf32> -> vector<8x256xf32>
    %123 = arith.truncf %122 : vector<8x256xf32> to vector<8x256xbf16>
    %c0_125 = arith.constant 0 : index
    %c0_126 = arith.constant 0 : index
    %c0_127 = arith.constant 0 : index
    %124 = vector.load %arg6[%c0_125, %c0_126, %c0_127] : memref<2x256x64xbf16, #tpu.memory_space<vmem>>, vector<1x256x64xbf16>
    %125 = vector.shape_cast %124 : vector<1x256x64xbf16> to vector<256x64xbf16>
    %cst_128 = arith.constant dense<0.000000e+00> : vector<8x64xf32>
    %126 = tpu.matmul %123, %125, %cst_128 {dimension_numbers = #tpu.dot_dimension_numbers<[1], [0], [0], [1], [0, 0, 1, 1], [], []>} : vector<8x256xbf16>, vector<256x64xbf16>, vector<8x64xf32> -> vector<8x64xf32>
    %127 = arith.addf %111, %126 : vector<8x64xf32>
    %c10_129 = arith.constant 10 : index
    %c0_130 = arith.constant 0 : index
    %128 = vector.load %arg18[%c10_129, %c0_130] : memref<48x64xf32, #tpu.memory_space<vmem>>, vector<4x64xf32>
    %c11_131 = arith.constant 11 : index
    %c0_132 = arith.constant 0 : index
    %129 = vector.load %arg18[%c11_131, %c0_132] : memref<48x64xf32, #tpu.memory_space<vmem>>, vector<4x64xf32>
    %c12_133 = arith.constant 12 : index
    %c0_134 = arith.constant 0 : index
    %130 = vector.load %arg18[%c12_133, %c0_134] : memref<48x64xf32, #tpu.memory_space<vmem>>, vector<4x64xf32>
    %c13_135 = arith.constant 13 : index
    %c0_136 = arith.constant 0 : index
    %131 = vector.load %arg18[%c13_135, %c0_136] : memref<48x64xf32, #tpu.memory_space<vmem>>, vector<4x64xf32>
    %132 = tpu.concatenate %128, %129, %130, %131 in 1 : vector<4x64xf32>, vector<4x64xf32>, vector<4x64xf32>, vector<4x64xf32> -> vector<4x256xf32>
    %c34_137 = arith.constant 34 : index
    %c0_138 = arith.constant 0 : index
    %133 = vector.load %arg18[%c34_137, %c0_138] : memref<48x64xf32, #tpu.memory_space<vmem>>, vector<4x64xf32>
    %c35_139 = arith.constant 35 : index
    %c0_140 = arith.constant 0 : index
    %134 = vector.load %arg18[%c35_139, %c0_140] : memref<48x64xf32, #tpu.memory_space<vmem>>, vector<4x64xf32>
    %c36_141 = arith.constant 36 : index
    %c0_142 = arith.constant 0 : index
    %135 = vector.load %arg18[%c36_141, %c0_142] : memref<48x64xf32, #tpu.memory_space<vmem>>, vector<4x64xf32>
    %c37_143 = arith.constant 37 : index
    %c0_144 = arith.constant 0 : index
    %136 = vector.load %arg18[%c37_143, %c0_144] : memref<48x64xf32, #tpu.memory_space<vmem>>, vector<4x64xf32>
    %137 = tpu.concatenate %133, %134, %135, %136 in 1 : vector<4x64xf32>, vector<4x64xf32>, vector<4x64xf32>, vector<4x64xf32> -> vector<4x256xf32>
    %138 = tpu.concatenate %132, %137 in 0 : vector<4x256xf32>, vector<4x256xf32> -> vector<8x256xf32>
    %139 = arith.truncf %138 : vector<8x256xf32> to vector<8x256xbf16>
    %c1_145 = arith.constant 1 : index
    %c0_146 = arith.constant 0 : index
    %c0_147 = arith.constant 0 : index
    %140 = vector.load %arg6[%c1_145, %c0_146, %c0_147] : memref<2x256x64xbf16, #tpu.memory_space<vmem>>, vector<1x256x64xbf16>
    %141 = vector.shape_cast %140 : vector<1x256x64xbf16> to vector<256x64xbf16>
    %cst_148 = arith.constant dense<0.000000e+00> : vector<8x64xf32>
    %142 = tpu.matmul %139, %141, %cst_148 {dimension_numbers = #tpu.dot_dimension_numbers<[1], [0], [0], [1], [0, 0, 1, 1], [], []>} : vector<8x256xbf16>, vector<256x64xbf16>, vector<8x64xf32> -> vector<8x64xf32>
    %143 = arith.addf %127, %142 : vector<8x64xf32>
    %c0_149 = arith.constant 0 : index
    %c0_150 = arith.constant 0 : index
    %144 = vector.load %arg7[%c0_149, %c0_150] : memref<1x64xf32, #tpu.memory_space<vmem>>, vector<1x64xf32>
    %145 = vector.broadcast %144 : vector<1x64xf32> to vector<8x64xf32>
    %146 = arith.addf %143, %145 : vector<8x64xf32>
    %cst_151 = arith.constant 0.000000e+00 : f32
    %147 = vector.broadcast %cst_151 : f32 to vector<8x64xf32>
    %148 = arith.maximumf %146, %147 : vector<8x64xf32>
    %149 = vector.extract_strided_slice %148 {offsets = [0, 0], sizes = [4, 64], strides = [1, 1]} : vector<8x64xf32> to vector<4x64xf32>
    %c0_152 = arith.constant 0 : index
    %c0_153 = arith.constant 0 : index
    %150 = vector.load %arg19[%c0_152, %c0_153] : memref<48x64xf32, #tpu.memory_space<vmem>>, vector<8x64xf32>
    tpu.vector_store %arg19[%c0_152, %c0_153], %0 {strides = array<i32>} : memref<48x64xf32, #tpu.memory_space<vmem>>, vector<8x64xf32>,
    %cst_154 = arith.constant 0.000000e+00 : f32
    %151 = vector.broadcast %cst_154 : f32 to vector<4x64xf32>
    %152 = tpu.concatenate %149, %151 in 0 : vector<4x64xf32>, vector<4x64xf32> -> vector<8x64xf32>
    %c8_155 = arith.constant 8 : index
    %c0_156 = arith.constant 0 : index
    %153 = vector.load %arg19[%c8_155, %c0_156] : memref<48x64xf32, #tpu.memory_space<vmem>>, vector<8x64xf32>
    tpu.vector_store %arg19[%c8_155, %c0_156], %152 {strides = array<i32>} : memref<48x64xf32, #tpu.memory_space<vmem>>, vector<8x64xf32>,
    %c7_157 = arith.constant 7 : index
    %c0_158 = arith.constant 0 : index
    %154 = tpu.strided_load %arg19[%c7_157, %c0_158] {strides = array<i32: 2, 1>} : memref<48x64xf32, #tpu.memory_space<vmem>>, vector<2x64xf32>
    %c8_159 = arith.constant 8 : index
    %c0_160 = arith.constant 0 : index
    %155 = tpu.strided_load %arg19[%c8_159, %c0_160] {strides = array<i32: 2, 1>} : memref<48x64xf32, #tpu.memory_space<vmem>>, vector<2x64xf32>
    %c9_161 = arith.constant 9 : index
    %c0_162 = arith.constant 0 : index
    %156 = tpu.strided_load %arg19[%c9_161, %c0_162] {strides = array<i32: 2, 1>} : memref<48x64xf32, #tpu.memory_space<vmem>>, vector<2x64xf32>
    %157 = arith.maximumf %154, %155 : vector<2x64xf32>
    %158 = arith.maximumf %157, %156 : vector<2x64xf32>
    %159 = vector.extract_strided_slice %158 {offsets = [0, 0], sizes = [1, 64], strides = [1, 1]} : vector<2x64xf32> to vector<1x64xf32>
    %160 = vector.extract_strided_slice %158 {offsets = [1, 0], sizes = [1, 64], strides = [1, 1]} : vector<2x64xf32> to vector<1x64xf32>
    %161 = tpu.concatenate %159, %160 in 1 : vector<1x64xf32>, vector<1x64xf32> -> vector<1x128xf32>
    %162 = vector.extract_strided_slice %148 {offsets = [4, 0], sizes = [4, 64], strides = [1, 1]} : vector<8x64xf32> to vector<4x64xf32>
    %c24_163 = arith.constant 24 : index
    %c0_164 = arith.constant 0 : index
    %163 = vector.load %arg19[%c24_163, %c0_164] : memref<48x64xf32, #tpu.memory_space<vmem>>, vector<8x64xf32>
    tpu.vector_store %arg19[%c24_163, %c0_164], %0 {strides = array<i32>} : memref<48x64xf32, #tpu.memory_space<vmem>>, vector<8x64xf32>,
    %cst_165 = arith.constant 0.000000e+00 : f32
    %164 = vector.broadcast %cst_165 : f32 to vector<4x64xf32>
    %165 = tpu.concatenate %162, %164 in 0 : vector<4x64xf32>, vector<4x64xf32> -> vector<8x64xf32>
    %c32_166 = arith.constant 32 : index
    %c0_167 = arith.constant 0 : index
    %166 = vector.load %arg19[%c32_166, %c0_167] : memref<48x64xf32, #tpu.memory_space<vmem>>, vector<8x64xf32>
    tpu.vector_store %arg19[%c32_166, %c0_167], %165 {strides = array<i32>} : memref<48x64xf32, #tpu.memory_space<vmem>>, vector<8x64xf32>,
    %c31_168 = arith.constant 31 : index
    %c0_169 = arith.constant 0 : index
    %167 = tpu.strided_load %arg19[%c31_168, %c0_169] {strides = array<i32: 2, 1>} : memref<48x64xf32, #tpu.memory_space<vmem>>, vector<2x64xf32>
    %c32_170 = arith.constant 32 : index
    %c0_171 = arith.constant 0 : index
    %168 = tpu.strided_load %arg19[%c32_170, %c0_171] {strides = array<i32: 2, 1>} : memref<48x64xf32, #tpu.memory_space<vmem>>, vector<2x64xf32>
    %c33_172 = arith.constant 33 : index
    %c0_173 = arith.constant 0 : index
    %169 = tpu.strided_load %arg19[%c33_172, %c0_173] {strides = array<i32: 2, 1>} : memref<48x64xf32, #tpu.memory_space<vmem>>, vector<2x64xf32>
    %170 = arith.maximumf %167, %168 : vector<2x64xf32>
    %171 = arith.maximumf %170, %169 : vector<2x64xf32>
    %172 = vector.extract_strided_slice %171 {offsets = [0, 0], sizes = [1, 64], strides = [1, 1]} : vector<2x64xf32> to vector<1x64xf32>
    %173 = vector.extract_strided_slice %171 {offsets = [1, 0], sizes = [1, 64], strides = [1, 1]} : vector<2x64xf32> to vector<1x64xf32>
    %174 = tpu.concatenate %172, %173 in 1 : vector<1x64xf32>, vector<1x64xf32> -> vector<1x128xf32>
    %175 = tpu.concatenate %161, %174 in 0 : vector<1x128xf32>, vector<1x128xf32> -> vector<2x128xf32>
    %176 = arith.truncf %175 : vector<2x128xf32> to vector<2x128xbf16>
    %c0_174 = arith.constant 0 : index
    %c0_175 = arith.constant 0 : index
    %177 = vector.load %arg8[%c0_174, %c0_175] : memref<128x500xbf16, #tpu.memory_space<vmem>>, vector<128x500xbf16>
    %cst_176 = arith.constant dense<0.000000e+00> : vector<2x500xf32>
    %178 = tpu.matmul %176, %177, %cst_176 {dimension_numbers = #tpu.dot_dimension_numbers<[1], [0], [0], [1], [0, 0, 1, 1], [], []>} : vector<2x128xbf16>, vector<128x500xbf16>, vector<2x500xf32> -> vector<2x500xf32>
    %c0_177 = arith.constant 0 : index
    %c0_178 = arith.constant 0 : index
    %179 = vector.load %arg9[%c0_177, %c0_178] : memref<1x500xf32, #tpu.memory_space<vmem>>, vector<1x500xf32>
    %180 = vector.broadcast %179 : vector<1x500xf32> to vector<2x500xf32>
    %181 = arith.addf %178, %180 : vector<2x500xf32>
    %cst_179 = arith.constant 0.000000e+00 : f32
    %182 = vector.broadcast %cst_179 : f32 to vector<2x500xf32>
    %183 = arith.maximumf %181, %182 : vector<2x500xf32>
    %184 = arith.truncf %183 : vector<2x500xf32> to vector<2x500xbf16>
    %c0_180 = arith.constant 0 : index
    %c0_181 = arith.constant 0 : index
    %185 = vector.load %arg10[%c0_180, %c0_181] : memref<500x100xbf16, #tpu.memory_space<vmem>>, vector<500x100xbf16>
    %cst_182 = arith.constant dense<0.000000e+00> : vector<2x100xf32>
    %186 = tpu.matmul %184, %185, %cst_182 {dimension_numbers = #tpu.dot_dimension_numbers<[1], [0], [0], [1], [0, 0, 1, 1], [], []>} : vector<2x500xbf16>, vector<500x100xbf16>, vector<2x100xf32> -> vector<2x100xf32>
    %c0_183 = arith.constant 0 : index
    %c0_184 = arith.constant 0 : index
    %187 = vector.load %arg11[%c0_183, %c0_184] : memref<1x100xf32, #tpu.memory_space<vmem>>, vector<1x100xf32>
    %188 = vector.broadcast %187 : vector<1x100xf32> to vector<2x100xf32>
    %189 = arith.addf %186, %188 : vector<2x100xf32>
    %cst_185 = arith.constant 0.000000e+00 : f32
    %190 = vector.broadcast %cst_185 : f32 to vector<2x100xf32>
    %191 = arith.maximumf %189, %190 : vector<2x100xf32>
    %192 = arith.truncf %191 : vector<2x100xf32> to vector<2x100xbf16>
    %c0_186 = arith.constant 0 : index
    %c0_187 = arith.constant 0 : index
    %193 = vector.load %arg12[%c0_186, %c0_187] : memref<100x3xbf16, #tpu.memory_space<vmem>>, vector<100x3xbf16>
    %cst_188 = arith.constant dense<0.000000e+00> : vector<2x3xf32>
    %194 = tpu.matmul %192, %193, %cst_188 {dimension_numbers = #tpu.dot_dimension_numbers<[1], [0], [0], [1], [0, 0, 1, 1], [], []>} : vector<2x100xbf16>, vector<100x3xbf16>, vector<2x3xf32> -> vector<2x3xf32>
    %c0_189 = arith.constant 0 : index
    %c0_190 = arith.constant 0 : index
    %195 = vector.load %arg13[%c0_189, %c0_190] : memref<1x3xf32, #tpu.memory_space<vmem>>, vector<1x3xf32>
    %196 = vector.broadcast %195 : vector<1x3xf32> to vector<2x3xf32>
    %197 = arith.addf %194, %196 : vector<2x3xf32>
    %c0_191 = arith.constant 0 : index
    %c0_192 = arith.constant 0 : index
    %198 = vector.load %arg14[%c0_191, %c0_192] : memref<2x3xf32, #tpu.memory_space<vmem>>, vector<2x3xf32>
    tpu.vector_store %arg14[%c0_191, %c0_192], %197 {strides = array<i32>} : memref<2x3xf32, #tpu.memory_space<vmem>>, vector<2x3xf32>,
    return
  }
  func.func @transform_0(%arg0: i32) -> (i32, i32) {
    %c0_i32 = arith.constant 0 : i32
    %c0_i32_0 = arith.constant 0 : i32
    %c0_i32_1 = arith.constant 0 : i32
    return %c0_i32, %c0_i32_0 : i32, i32
  }
  func.func @transform_1(%arg0: i32) -> (i32, i32) {
    %c0_i32 = arith.constant 0 : i32
    %c0_i32_0 = arith.constant 0 : i32
    %c0_i32_1 = arith.constant 0 : i32
    return %c0_i32, %c0_i32_0 : i32, i32
  }
  func.func @transform_2(%arg0: i32) -> (i32, i32) {
    %c0_i32 = arith.constant 0 : i32
    %c0_i32_0 = arith.constant 0 : i32
    %c0_i32_1 = arith.constant 0 : i32
    return %c0_i32, %c0_i32_0 : i32, i32
  }
  func.func @transform_3(%arg0: i32) -> (i32, i32, i32) {
    %c0_i32 = arith.constant 0 : i32
    %c0_i32_0 = arith.constant 0 : i32
    %c0_i32_1 = arith.constant 0 : i32
    %c0_i32_2 = arith.constant 0 : i32
    return %c0_i32, %c0_i32_0, %c0_i32_1 : i32, i32, i32
  }
  func.func @transform_4(%arg0: i32) -> (i32, i32) {
    %c0_i32 = arith.constant 0 : i32
    %c0_i32_0 = arith.constant 0 : i32
    %c0_i32_1 = arith.constant 0 : i32
    return %c0_i32, %c0_i32_0 : i32, i32
  }
  func.func @transform_5(%arg0: i32) -> (i32, i32, i32) {
    %c0_i32 = arith.constant 0 : i32
    %c0_i32_0 = arith.constant 0 : i32
    %c0_i32_1 = arith.constant 0 : i32
    %c0_i32_2 = arith.constant 0 : i32
    return %c0_i32, %c0_i32_0, %c0_i32_1 : i32, i32, i32
  }
  func.func @transform_6(%arg0: i32) -> (i32, i32) {
    %c0_i32 = arith.constant 0 : i32
    %c0_i32_0 = arith.constant 0 : i32
    %c0_i32_1 = arith.constant 0 : i32
    return %c0_i32, %c0_i32_0 : i32, i32
  }
  func.func @transform_7(%arg0: i32) -> (i32, i32) {
    %c0_i32 = arith.constant 0 : i32
    %c0_i32_0 = arith.constant 0 : i32
    %c0_i32_1 = arith.constant 0 : i32
    return %c0_i32, %c0_i32_0 : i32, i32
  }
  func.func @transform_8(%arg0: i32) -> (i32, i32) {
    %c0_i32 = arith.constant 0 : i32
    %c0_i32_0 = arith.constant 0 : i32
    %c0_i32_1 = arith.constant 0 : i32
    return %c0_i32, %c0_i32_0 : i32, i32
  }
  func.func @transform_9(%arg0: i32) -> (i32, i32) {
    %c0_i32 = arith.constant 0 : i32
    %c0_i32_0 = arith.constant 0 : i32
    %c0_i32_1 = arith.constant 0 : i32
    return %c0_i32, %c0_i32_0 : i32, i32
  }
  func.func @transform_10(%arg0: i32) -> (i32, i32) {
    %c0_i32 = arith.constant 0 : i32
    %c0_i32_0 = arith.constant 0 : i32
    %c0_i32_1 = arith.constant 0 : i32
    return %c0_i32, %c0_i32_0 : i32, i32
  }
  func.func @transform_11(%arg0: i32) -> (i32, i32) {
    %c0_i32 = arith.constant 0 : i32
    %c0_i32_0 = arith.constant 0 : i32
    %c0_i32_1 = arith.constant 0 : i32
    return %c0_i32, %c0_i32_0 : i32, i32
  }
  func.func @transform_12(%arg0: i32) -> (i32, i32) {
    %c0_i32 = arith.constant 0 : i32
    %c0_i32_0 = arith.constant 0 : i32
    %c0_i32_1 = arith.constant 0 : i32
    return %c0_i32, %c0_i32_0 : i32, i32
  }
  func.func @transform_13(%arg0: i32) -> (i32, i32) {
    %c0_i32 = arith.constant 0 : i32
    %c0_i32_0 = arith.constant 0 : i32
    %c0_i32_1 = arith.constant 0 : i32
    return %c0_i32, %c0_i32_0 : i32, i32
  }
}

</mosaic_0001>

<llo_original>
// kernel: furfaro_forward.1
$region0: #{furfaro_forward.1}
  #allocation0 [shape = 'u32[]', space=smem, size = 0x4, offset = 0x4, fixed_abs, tag = 'smem constant byte address 0x4 - core index']
  #allocation1 [shape = 'u32[72,128]{1,0:T(1,128)}', space=vmem, size = 0x9000, scoped, tag = 'internal scratch']
  #allocation2 [shape = 'f32[48,64]{1,0:T(8,128)}', space=vmem, size = 0x6000, scoped, tag = 'scratch operand']
  #allocation3 [shape = 'f32[48,64]{1,0:T(8,128)}', space=vmem, size = 0x6000, scoped, tag = 'scratch operand']
  #allocation4 [shape = 'f32[48,64]{1,0:T(8,128)}', space=vmem, size = 0x6000, scoped, tag = 'scratch operand']
  #allocation5 [shape = 'f32[48,64]{1,0:T(8,128)}', space=vmem, size = 0x6000, scoped, tag = 'scratch operand']
  #allocation6 [shape = 'f32[48,64]{1,0:T(8,128)}', space=vmem, size = 0x6000, scoped, tag = 'scratch operand']
  %s0 = inlined_call_operand.vmem [shape: bf16[32,124], index: 0, kind: input, shape index: {}]
  %s1 = inlined_call_operand.vmem [shape: bf16[124,64], index: 1, kind: input, shape index: {}]
  %s2 = inlined_call_operand.vmem [shape: f32[1,64], index: 2, kind: input, shape index: {}]
  %s3 = inlined_call_operand.vmem [shape: bf16[3,256,64], index: 3, kind: input, shape index: {}]
  %s4 = inlined_call_operand.vmem [shape: f32[1,64], index: 4, kind: input, shape index: {}]
  %s5 = inlined_call_operand.vmem [shape: bf16[2,256,64], index: 5, kind: input, shape index: {}]
  %s6 = inlined_call_operand.vmem [shape: f32[1,64], index: 6, kind: input, shape index: {}]
  %s7 = inlined_call_operand.vmem [shape: bf16[128,500], index: 7, kind: input, shape index: {}]
  %s8 = inlined_call_operand.vmem [shape: f32[1,500], index: 8, kind: input, shape index: {}]
  %s9 = inlined_call_operand.vmem [shape: bf16[500,100], index: 9, kind: input, shape index: {}]
  %s10 = inlined_call_operand.vmem [shape: f32[1,100], index: 10, kind: input, shape index: {}]
  %s11 = inlined_call_operand.vmem [shape: bf16[100,3], index: 11, kind: input, shape index: {}]
  %s12 = inlined_call_operand.vmem [shape: f32[1,3], index: 12, kind: input, shape index: {}]
  %s13 = inlined_call_operand.hbm [shape: f32[2,3], index: 13, kind: output, shape index: {}]
  %s14 = sld [smem:[#allocation0]]
  $region62: #{furfaro_forward.1} parent=0
    _
  %s16 = ssub.s32 1, %s14
  %s17 = scalar_select 0, %s16, %s14
  $region1: #{furfaro_forward.1} parent=0
    #allocation7 [shape = 'u8[1024]{0}', space=vmem, size = 0x400, scoped, tag = 'output window, operand 0, single buffered']
    #allocation8 [shape = 's32[1]{0}', space=sflag, size = 0x4, scoped, tag = 'scoped memory for furfaro_forward.1']
    %18 = vsyncpa [#allocation8], 0
    // Predicated region
    $region2: #{furfaro_forward.1} parent=1 // pred_check
      _
    $region3: #{furfaro_forward.1} parent=1 // pred_check_branch
      %20 = sbr.rel (0) target = $region5
    $region4: #{furfaro_forward.1} parent=1 // pred_region
      _
    $region5: #{furfaro_forward.1} parent=1 // pred_fallthru
      _
    // Predicated region
    $region6: #{furfaro_forward.1} parent=1 // pred_check
      _
    $region7: #{furfaro_forward.1} parent=1 // pred_check_branch
      %22 = sbr.rel (0) target = $region9
    $region8: #{furfaro_forward.1} parent=1 // pred_region
      _
    $region9: #{furfaro_forward.1} parent=1 // pred_fallthru
      _
    // Predicated region
    $region10: #{furfaro_forward.1} parent=1 // pred_check
      _
    $region11: #{furfaro_forward.1} parent=1 // pred_check_branch
      %24 = sbr.rel (0) target = $region13
    $region12: #{furfaro_forward.1} parent=1 // pred_region
      _
    $region13: #{furfaro_forward.1} parent=1 // pred_fallthru
      _
    // Predicated region
    $region14: #{furfaro_forward.1} parent=1 // pred_check
      _
    $region15: #{furfaro_forward.1} parent=1 // pred_check_branch
      %26 = sbr.rel (0) target = $region17
    $region16: #{furfaro_forward.1} parent=1 // pred_region
      _
    $region17: #{furfaro_forward.1} parent=1 // pred_fallthru
      _
    // Predicated region
    $region18: #{furfaro_forward.1} parent=1 // pred_check
      _
    $region19: #{furfaro_forward.1} parent=1 // pred_check_branch
      %28 = sbr.rel (0) target = $region21
    $region20: #{furfaro_forward.1} parent=1 // pred_region
      _
    $region21: #{furfaro_forward.1} parent=1 // pred_fallthru
      _
    // Predicated region
    $region22: #{furfaro_forward.1} parent=1 // pred_check
      _
    $region23: #{furfaro_forward.1} parent=1 // pred_check_branch
      %30 = sbr.rel (0) target = $region25
    $region24: #{furfaro_forward.1} parent=1 // pred_region
      _
    $region25: #{furfaro_forward.1} parent=1 // pred_fallthru
      _
    // Predicated region
    $region26: #{furfaro_forward.1} parent=1 // pred_check
      _
    $region27: #{furfaro_forward.1} parent=1 // pred_check_branch
      %32 = sbr.rel (0) target = $region29
    $region28: #{furfaro_forward.1} parent=1 // pred_region
      _
    $region29: #{furfaro_forward.1} parent=1 // pred_fallthru
      _
    // Predicated region
    $region30: #{furfaro_forward.1} parent=1 // pred_check
      _
    $region31: #{furfaro_forward.1} parent=1 // pred_check_branch
      %34 = sbr.rel (0) target = $region33
    $region32: #{furfaro_forward.1} parent=1 // pred_region
      _
    $region33: #{furfaro_forward.1} parent=1 // pred_fallthru
      _
    // Predicated region
    $region34: #{furfaro_forward.1} parent=1 // pred_check
      _
    $region35: #{furfaro_forward.1} parent=1 // pred_check_branch
      %36 = sbr.rel (0) target = $region37
    $region36: #{furfaro_forward.1} parent=1 // pred_region
      _
    $region37: #{furfaro_forward.1} parent=1 // pred_fallthru
      _
    // Predicated region
    $region38: #{furfaro_forward.1} parent=1 // pred_check
      _
    $region39: #{furfaro_forward.1} parent=1 // pred_check_branch
      %38 = sbr.rel (0) target = $region41
    $region40: #{furfaro_forward.1} parent=1 // pred_region
      _
    $region41: #{furfaro_forward.1} parent=1 // pred_fallthru
      _
    // Predicated region
    $region42: #{furfaro_forward.1} parent=1 // pred_check
      _
    $region43: #{furfaro_forward.1} parent=1 // pred_check_branch
      %40 = sbr.rel (0) target = $region45
    $region44: #{furfaro_forward.1} parent=1 // pred_region
      _
    $region45: #{furfaro_forward.1} parent=1 // pred_fallthru
      _
    // Predicated region
    $region46: #{furfaro_forward.1} parent=1 // pred_check
      _
    $region47: #{furfaro_forward.1} parent=1 // pred_check_branch
      %42 = sbr.rel (0) target = $region49
    $region48: #{furfaro_forward.1} parent=1 // pred_region
      _
    $region49: #{furfaro_forward.1} parent=1 // pred_fallthru
      _
    // Predicated region
    $region50: #{furfaro_forward.1} parent=1 // pred_check
      _
    $region51: #{furfaro_forward.1} parent=1 // pred_check_branch
      %44 = sbr.rel (0) target = $region53
    $region52: #{furfaro_forward.1} parent=1 // pred_region
      _
    $region53: #{furfaro_forward.1} parent=1 // pred_fallthru
      _
    %v46 = vld [vmem:[%s0] sm:$0xf]
    %v47 = vld [vmem:[%s0 + $0x4] sm:$0xf]
    %v48 = vld [vmem:[%s0 + $0x8] sm:$0xf]
    %v49 = vld [vmem:[%s0 + $0xc] sm:$0xf]
    %v50 = vld [vmem:[%s1] sm:$0xf]
    %v51 = vld [vmem:[%s1 + $0x4] sm:$0xf]
    %v52 = vld [vmem:[%s1 + $0x8] sm:$0xf]
    %v53 = vld [vmem:[%s1 + $0xc] sm:$0xf]
    %v54 = vld [vmem:[%s1 + $0x10] sm:$0xf]
    %v55 = vld [vmem:[%s1 + $0x14] sm:$0xf]
    %v56 = vld [vmem:[%s1 + $0x18] sm:$0xf]
    %v57 = vld [vmem:[%s1 + $0x1c] sm:$0xf]
    %v58 = vld [vmem:[%s1 + $0x20] sm:$0xf]
    %v59 = vld [vmem:[%s1 + $0x24] sm:$0xf]
    %v60 = vld [vmem:[%s1 + $0x28] sm:$0xf]
    %v61 = vld [vmem:[%s1 + $0x2c] sm:$0xf]
    %v62 = vld [vmem:[%s1 + $0x30] sm:$0xf]
    %v63 = vld [vmem:[%s1 + $0x34] sm:$0xf]
    %v64 = vld [vmem:[%s1 + $0x38] sm:$0xf]
    %v65 = vld [vmem:[%s1 + $0x3c] sm:$0x3]
    %v66 = vld [vmem:[%s2] sm:$0x1]
    %v68 = vperm.slane %v66, 0
    %v74 = vunpack.c.l.b16 %v46
    %v75 = vunpack.c.l.b16 %v47
    %v76 = vunpack.c.l.b16 %v48
    %v77 = vunpack.c.l.b16 %v49
    %v78 = vpack.c.b16 %v75, %v74
    %v79 = vpack.c.b16 %v77, %v76
    %v96 = vunpack.c.l.b16 %v50
    %v97 = vunpack.c.l.b16 %v51
    %v98 = vunpack.c.l.b16 %v52
    %v99 = vunpack.c.l.b16 %v53
    %v100 = vunpack.c.l.b16 %v54
    %v101 = vunpack.c.l.b16 %v55
    %v102 = vunpack.c.l.b16 %v56
    %v103 = vunpack.c.l.b16 %v57
    %v104 = vunpack.c.l.b16 %v58
    %v105 = vunpack.c.l.b16 %v59
    %v106 = vunpack.c.l.b16 %v60
    %v107 = vunpack.c.l.b16 %v61
    %v108 = vunpack.c.l.b16 %v62
    %v109 = vunpack.c.l.b16 %v63
    %v110 = vunpack.c.l.b16 %v64
    %v111 = vunpack.c.l.b16 %v65
    %v112 = vpack.c.b16 %v97, %v96
    %v113 = vpack.c.b16 %v99, %v98
    %v114 = vpack.c.b16 %v101, %v100
    %v115 = vpack.c.b16 %v103, %v102
    %v116 = vpack.c.b16 %v105, %v104
    %v117 = vpack.c.b16 %v107, %v106
    %v118 = vpack.c.b16 %v109, %v108
    %v119 = vpack.c.b16 %v111, %v110
    %vm127 = vcmask 1014784
    %v129 = vsel %vm127, %v78, 0
    %v132 = vsel %vm127, %v79, 0
    %vm134 = vcmask 1045504
    %v136 = vsel %vm134, %v119, 0
    %138 = vmatpush.bf16.msra.mxu0 %v136
    %139 = vmatpush.bf16.msra.mxu0 %v118
    %140 = vmatpush.bf16.msra.mxu0 %v117
    %141 = vmatpush.bf16.msra.mxu0 %v116
    %142 = vmatpush.bf16.msra.mxu0 %v115
    %143 = vmatpush.bf16.msra.mxu0 %v114
    %144 = vmatpush.bf16.msra.mxu0 %v113
    %145 = vmatpush.bf16.msra.mxu0 %v112
    %146 = vmatmul.bf16.gmra.mxu0 %v129
    %v147 = vpop.f32.mrf.mxu0
    %v148 = vadd.f32 %v68, %v147
    %v149 = vpop.f32.mrf.mxu0
    %v150 = vadd.f32 %v68, %v149
    %151 = vmatmul.bf16.gmra.mxu0 %v132
    %v152 = vpop.f32.mrf.mxu0
    %v153 = vadd.f32 %v68, %v152
    %v154 = vpop.f32.mrf.mxu0
    %v155 = vadd.f32 %v68, %v154
    %156 = vdwg.mxu0
    %v157 = vmax.f32 %v148, 0.0
    %v158 = vmax.f32 %v150, 0.0
    %v159 = vmax.f32 %v153, 0.0
    %v160 = vmax.f32 %v155, 0.0
    %vm161 = vcmask 523264
    %162 = vst.msk [vmem:[#allocation2] sm:$0xff] %vm161, 0.0
    %163 = vst.msk [vmem:[#allocation2 + $0x8] sm:$0xff] %vm161, %v157
    %164 = vst.msk [vmem:[#allocation2 + $0x10] sm:$0xff] %vm161, %v158
    %s165 = scalar_lea.vmem [#allocation2], 7
    %v166 = vld [vmem:[%s165] ss:$2 sm:$0xff]
    %s167 = scalar_lea.vmem [#allocation2], 8
    %v168 = vld [vmem:[%s167] ss:$2 sm:$0xff]
    %s169 = scalar_lea.vmem [#allocation2], 9
    %v170 = vld [vmem:[%s169] ss:$2 sm:$0xff]
    %v171 = vmax.f32 %v166, %v168
    %v172 = vmax.f32 %v171, %v170
    %173 = vst.msk [vmem:[#allocation3] sm:$0xff] %vm161, 0.0
    %174 = vst.msk [vmem:[#allocation3 + $0x8] sm:$0xff] %vm161, %v172
    %175 = vst.msk [vmem:[#allocation3 + $0x10] sm:$0xff] %vm161, 0.0
    %176 = vst.msk [vmem:[#allocation2 + $0x18] sm:$0xff] %vm161, 0.0
    %177 = vst.msk [vmem:[#allocation2 + $0x20] sm:$0xff] %vm161, %v159
    %178 = vst.msk [vmem:[#allocation2 + $0x28] sm:$0xff] %vm161, %v160
    %s179 = scalar_lea.vmem [#allocation2], 31
    %v180 = vld [vmem:[%s179] ss:$2 sm:$0xff]
    %s181 = scalar_lea.vmem [#allocation2], 32
    %v182 = vld [vmem:[%s181] ss:$2 sm:$0xff]
    %s183 = scalar_lea.vmem [#allocation2], 33
    %v184 = vld [vmem:[%s183] ss:$2 sm:$0xff]
    %v185 = vmax.f32 %v180, %v182
    %v186 = vmax.f32 %v185, %v184
    %187 = vst.msk [vmem:[#allocation3 + $0x18] sm:$0xff] %vm161, 0.0
    %188 = vst.msk [vmem:[#allocation3 + $0x20] sm:$0xff] %vm161, %v186
    %189 = vst.msk [vmem:[#allocation3 + $0x28] sm:$0xff] %vm161, 0.0
    %v190 = vld [vmem:[#allocation3 + $0x3] sm:$0xff]
    %v191 = vld [vmem:[#allocation3 + $0x4] sm:$0xff]
    %v192 = vld [vmem:[#allocation3 + $0x5] sm:$0xff]
    %v193 = vld [vmem:[#allocation3 + $0x6] sm:$0xff]
    %195 = vrot.lane.b32.xlu0 %v191, 64
    %v196 = vpop.permute.xlu0 %195
    %199 = vrot.lane.b32.xlu0 %v193, 64
    %v200 = vpop.permute.xlu0 %199
    %v202 = vsel %vm161, %v190, %v196
    %v203 = vsel %vm161, %v192, %v200
    %v204 = vld [vmem:[#allocation3 + $0x1b] sm:$0xff]
    %v205 = vld [vmem:[#allocation3 + $0x1c] sm:$0xff]
    %v206 = vld [vmem:[#allocation3 + $0x1d] sm:$0xff]
    %v207 = vld [vmem:[#allocation3 + $0x1e] sm:$0xff]
    %209 = vrot.lane.b32.xlu0 %v205, 64
    %v210 = vpop.permute.xlu0 %209
    %213 = vrot.lane.b32.xlu0 %v207, 64
    %v214 = vpop.permute.xlu0 %213
    %v216 = vsel %vm161, %v204, %v210
    %v217 = vsel %vm161, %v206, %v214
    %v218 = vpack.c.bf16 %v216, %v202
    %v219 = vpack.c.bf16 %v217, %v203
    %v220 = vld [vmem:[%s3] sm:$0xf]
    %v221 = vld [vmem:[%s3 + $0x4] sm:$0xf]
    %v222 = vld [vmem:[%s3 + $0x8] sm:$0xf]
    %v223 = vld [vmem:[%s3 + $0xc] sm:$0xf]
    %v224 = vld [vmem:[%s3 + $0x10] sm:$0xf]
    %v225 = vld [vmem:[%s3 + $0x14] sm:$0xf]
    %v226 = vld [vmem:[%s3 + $0x18] sm:$0xf]
    %v227 = vld [vmem:[%s3 + $0x1c] sm:$0xf]
    %v228 = vld [vmem:[%s3 + $0x20] sm:$0xf]
    %v229 = vld [vmem:[%s3 + $0x24] sm:$0xf]
    %v230 = vld [vmem:[%s3 + $0x28] sm:$0xf]
    %v231 = vld [vmem:[%s3 + $0x2c] sm:$0xf]
    %v232 = vld [vmem:[%s3 + $0x30] sm:$0xf]
    %v233 = vld [vmem:[%s3 + $0x34] sm:$0xf]
    %v234 = vld [vmem:[%s3 + $0x38] sm:$0xf]
    %v235 = vld [vmem:[%s3 + $0x3c] sm:$0xf]
    %v236 = vld [vmem:[%s3 + $0x40] sm:$0xf]
    %v237 = vld [vmem:[%s3 + $0x44] sm:$0xf]
    %v238 = vld [vmem:[%s3 + $0x48] sm:$0xf]
    %v239 = vld [vmem:[%s3 + $0x4c] sm:$0xf]
    %v240 = vld [vmem:[%s3 + $0x50] sm:$0xf]
    %v241 = vld [vmem:[%s3 + $0x54] sm:$0xf]
    %v242 = vld [vmem:[%s3 + $0x58] sm:$0xf]
    %v243 = vld [vmem:[%s3 + $0x5c] sm:$0xf]
    %v244 = vld [vmem:[%s3 + $0x60] sm:$0xf]
    %v245 = vld [vmem:[%s3 + $0x64] sm:$0xf]
    %v246 = vld [vmem:[%s3 + $0x68] sm:$0xf]
    %v247 = vld [vmem:[%s3 + $0x6c] sm:$0xf]
    %v248 = vld [vmem:[%s3 + $0x70] sm:$0xf]
    %v249 = vld [vmem:[%s3 + $0x74] sm:$0xf]
    %v250 = vld [vmem:[%s3 + $0x78] sm:$0xf]
    %v251 = vld [vmem:[%s3 + $0x7c] sm:$0xf]
    %v252 = vld [vmem:[#allocation3 + $0x7] sm:$0xff]
    %v253 = vld [vmem:[#allocation3 + $0x8] sm:$0xff]
    %v254 = vld [vmem:[#allocation3 + $0x9] sm:$0xff]
    %v255 = vld [vmem:[#allocation3 + $0xa] sm:$0xff]
    %257 = vrot.lane.b32.xlu0 %v253, 64
    %v258 = vpop.permute.xlu0 %257
    %261 = vrot.lane.b32.xlu0 %v255, 64
    %v262 = vpop.permute.xlu0 %261
    %v264 = vsel %vm161, %v252, %v258
    %v265 = vsel %vm161, %v254, %v262
    %v266 = vld [vmem:[#allocation3 + $0x1f] sm:$0xff]
    %v267 = vld [vmem:[#allocation3 + $0x20] sm:$0xff]
    %v268 = vld [vmem:[#allocation3 + $0x21] sm:$0xff]
    %v269 = vld [vmem:[#allocation3 + $0x22] sm:$0xff]
    %271 = vrot.lane.b32.xlu0 %v267, 64
    %v272 = vpop.permute.xlu0 %271
    %275 = vrot.lane.b32.xlu0 %v269, 64
    %v276 = vpop.permute.xlu0 %275
    %v278 = vsel %vm161, %v266, %v272
    %v279 = vsel %vm161, %v268, %v276
    %v280 = vpack.c.bf16 %v278, %v264
    %v281 = vpack.c.bf16 %v279, %v265
    %s282 = scalar_lea.vmem %s3, 128
    %v283 = vld [vmem:[%s282] sm:$0xf]
    %v284 = vld [vmem:[%s282 + $0x4] sm:$0xf]
    %v285 = vld [vmem:[%s282 + $0x8] sm:$0xf]
    %v286 = vld [vmem:[%s282 + $0xc] sm:$0xf]
    %v287 = vld [vmem:[%s282 + $0x10] sm:$0xf]
    %v288 = vld [vmem:[%s282 + $0x14] sm:$0xf]
    %v289 = vld [vmem:[%s282 + $0x18] sm:$0xf]
    %v290 = vld [vmem:[%s282 + $0x1c] sm:$0xf]
    %v291 = vld [vmem:[%s282 + $0x20] sm:$0xf]
    %v292 = vld [vmem:[%s282 + $0x24] sm:$0xf]
    %v293 = vld [vmem:[%s282 + $0x28] sm:$0xf]
    %v294 = vld [vmem:[%s282 + $0x2c] sm:$0xf]
    %v295 = vld [vmem:[%s282 + $0x30] sm:$0xf]
    %v296 = vld [vmem:[%s282 + $0x34] sm:$0xf]
    %v297 = vld [vmem:[%s282 + $0x38] sm:$0xf]
    %v298 = vld [vmem:[%s282 + $0x3c] sm:$0xf]
    %v299 = vld [vmem:[%s282 + $0x40] sm:$0xf]
    %v300 = vld [vmem:[%s282 + $0x44] sm:$0xf]
    %v301 = vld [vmem:[%s282 + $0x48] sm:$0xf]
    %v302 = vld [vmem:[%s282 + $0x4c] sm:$0xf]
    %v303 = vld [vmem:[%s282 + $0x50] sm:$0xf]
    %v304 = vld [vmem:[%s282 + $0x54] sm:$0xf]
    %v305 = vld [vmem:[%s282 + $0x58] sm:$0xf]
    %v306 = vld [vmem:[%s282 + $0x5c] sm:$0xf]
    %v307 = vld [vmem:[%s282 + $0x60] sm:$0xf]
    %v308 = vld [vmem:[%s282 + $0x64] sm:$0xf]
    %v309 = vld [vmem:[%s282 + $0x68] sm:$0xf]
    %v310 = vld [vmem:[%s282 + $0x6c] sm:$0xf]
    %v311 = vld [vmem:[%s282 + $0x70] sm:$0xf]
    %v312 = vld [vmem:[%s282 + $0x74] sm:$0xf]
    %v313 = vld [vmem:[%s282 + $0x78] sm:$0xf]
    %v314 = vld [vmem:[%s282 + $0x7c] sm:$0xf]
    %v347 = vunpack.c.l.b16 %v283
    %v348 = vunpack.c.l.b16 %v284
    %v349 = vunpack.c.l.b16 %v285
    %v350 = vunpack.c.l.b16 %v286
    %v351 = vunpack.c.l.b16 %v287
    %v352 = vunpack.c.l.b16 %v288
    %v353 = vunpack.c.l.b16 %v289
    %v354 = vunpack.c.l.b16 %v290
    %v355 = vunpack.c.l.b16 %v291
    %v356 = vunpack.c.l.b16 %v292
    %v357 = vunpack.c.l.b16 %v293
    %v358 = vunpack.c.l.b16 %v294
    %v359 = vunpack.c.l.b16 %v295
    %v360 = vunpack.c.l.b16 %v296
    %v361 = vunpack.c.l.b16 %v297
    %v362 = vunpack.c.l.b16 %v298
    %v363 = vunpack.c.l.b16 %v299
    %v364 = vunpack.c.l.b16 %v300
    %v365 = vunpack.c.l.b16 %v301
    %v366 = vunpack.c.l.b16 %v302
    %v367 = vunpack.c.l.b16 %v303
    %v368 = vunpack.c.l.b16 %v304
    %v369 = vunpack.c.l.b16 %v305
    %v370 = vunpack.c.l.b16 %v306
    %v371 = vunpack.c.l.b16 %v307
    %v372 = vunpack.c.l.b16 %v308
    %v373 = vunpack.c.l.b16 %v309
    %v374 = vunpack.c.l.b16 %v310
    %v375 = vunpack.c.l.b16 %v311
    %v376 = vunpack.c.l.b16 %v312
    %v377 = vunpack.c.l.b16 %v313
    %v378 = vunpack.c.l.b16 %v314
    %v379 = vpack.c.b16 %v348, %v347
    %v380 = vpack.c.b16 %v350, %v349
    %v381 = vpack.c.b16 %v352, %v351
    %v382 = vpack.c.b16 %v354, %v353
    %v383 = vpack.c.b16 %v356, %v355
    %v384 = vpack.c.b16 %v358, %v357
    %v385 = vpack.c.b16 %v360, %v359
    %v386 = vpack.c.b16 %v362, %v361
    %v387 = vpack.c.b16 %v364, %v363
    %v388 = vpack.c.b16 %v366, %v365
    %v389 = vpack.c.b16 %v368, %v367
    %v390 = vpack.c.b16 %v370, %v369
    %v391 = vpack.c.b16 %v372, %v371
    %v392 = vpack.c.b16 %v374, %v373
    %v393 = vpack.c.b16 %v376, %v375
    %v394 = vpack.c.b16 %v378, %v377
    %411 = vmatpush.bf16.msra.mxu0 %v386
    %412 = vmatpush.bf16.msra.mxu0 %v385
    %413 = vmatpush.bf16.msra.mxu0 %v384
    %414 = vmatpush.bf16.msra.mxu0 %v383
    %415 = vmatpush.bf16.msra.mxu0 %v382
    %416 = vmatpush.bf16.msra.mxu0 %v381
    %417 = vmatpush.bf16.msra.mxu0 %v380
    %418 = vmatpush.bf16.msra.mxu0 %v379
    %419 = vmatmul.bf16.gmra.mxu0 %v280
    %v420 = vpop.f32.mrf.mxu0
    %v421 = vadd.f32 0.0, %v420
    %v422 = vpop.f32.mrf.mxu0
    %v423 = vadd.f32 0.0, %v422
    %424 = vdwg.mxu0
    %425 = vmatpush.bf16.msra.mxu0 %v394
    %426 = vmatpush.bf16.msra.mxu0 %v393
    %427 = vmatpush.bf16.msra.mxu0 %v392
    %428 = vmatpush.bf16.msra.mxu0 %v391
    %429 = vmatpush.bf16.msra.mxu0 %v390
    %430 = vmatpush.bf16.msra.mxu0 %v389
    %431 = vmatpush.bf16.msra.mxu0 %v388
    %432 = vmatpush.bf16.msra.mxu0 %v387
    %433 = vmatmul.bf16.gmra.mxu0 %v281
    %v434 = vpop.f32.mrf.mxu0
    %v435 = vadd.f32 %v421, %v434
    %v436 = vpop.f32.mrf.mxu0
    %v437 = vadd.f32 %v423, %v436
    %438 = vdwg.mxu0
    %v471 = vunpack.c.l.b16 %v220
    %v472 = vunpack.c.l.b16 %v221
    %v473 = vunpack.c.l.b16 %v222
    %v474 = vunpack.c.l.b16 %v223
    %v475 = vunpack.c.l.b16 %v224
    %v476 = vunpack.c.l.b16 %v225
    %v477 = vunpack.c.l.b16 %v226
    %v478 = vunpack.c.l.b16 %v227
    %v479 = vunpack.c.l.b16 %v228
    %v480 = vunpack.c.l.b16 %v229
    %v481 = vunpack.c.l.b16 %v230
    %v482 = vunpack.c.l.b16 %v231
    %v483 = vunpack.c.l.b16 %v232
    %v484 = vunpack.c.l.b16 %v233
    %v485 = vunpack.c.l.b16 %v234
    %v486 = vunpack.c.l.b16 %v235
    %v487 = vunpack.c.l.b16 %v236
    %v488 = vunpack.c.l.b16 %v237
    %v489 = vunpack.c.l.b16 %v238
    %v490 = vunpack.c.l.b16 %v239
    %v491 = vunpack.c.l.b16 %v240
    %v492 = vunpack.c.l.b16 %v241
    %v493 = vunpack.c.l.b16 %v242
    %v494 = vunpack.c.l.b16 %v243
    %v495 = vunpack.c.l.b16 %v244
    %v496 = vunpack.c.l.b16 %v245
    %v497 = vunpack.c.l.b16 %v246
    %v498 = vunpack.c.l.b16 %v247
    %v499 = vunpack.c.l.b16 %v248
    %v500 = vunpack.c.l.b16 %v249
    %v501 = vunpack.c.l.b16 %v250
    %v502 = vunpack.c.l.b16 %v251
    %v503 = vpack.c.b16 %v472, %v471
    %v504 = vpack.c.b16 %v474, %v473
    %v505 = vpack.c.b16 %v476, %v475
    %v506 = vpack.c.b16 %v478, %v477
    %v507 = vpack.c.b16 %v480, %v479
    %v508 = vpack.c.b16 %v482, %v481
    %v509 = vpack.c.b16 %v484, %v483
    %v510 = vpack.c.b16 %v486, %v485
    %v511 = vpack.c.b16 %v488, %v487
    %v512 = vpack.c.b16 %v490, %v489
    %v513 = vpack.c.b16 %v492, %v491
    %v514 = vpack.c.b16 %v494, %v493
    %v515 = vpack.c.b16 %v496, %v495
    %v516 = vpack.c.b16 %v498, %v497
    %v517 = vpack.c.b16 %v500, %v499
    %v518 = vpack.c.b16 %v502, %v501
    %535 = vmatpush.bf16.msra.mxu0 %v510
    %536 = vmatpush.bf16.msra.mxu0 %v509
    %537 = vmatpush.bf16.msra.mxu0 %v508
    %538 = vmatpush.bf16.msra.mxu0 %v507
    %539 = vmatpush.bf16.msra.mxu0 %v506
    %540 = vmatpush.bf16.msra.mxu0 %v505
    %541 = vmatpush.bf16.msra.mxu0 %v504
    %542 = vmatpush.bf16.msra.mxu0 %v503
    %543 = vmatmul.bf16.gmra.mxu0 %v218
    %v544 = vpop.f32.mrf.mxu0
    %v545 = vadd.f32 %v435, %v544
    %v546 = vpop.f32.mrf.mxu0
    %v547 = vadd.f32 %v437, %v546
    %548 = vdwg.mxu0
    %549 = vmatpush.bf16.msra.mxu0 %v518
    %550 = vmatpush.bf16.msra.mxu0 %v517
    %551 = vmatpush.bf16.msra.mxu0 %v516
    %552 = vmatpush.bf16.msra.mxu0 %v515
    %553 = vmatpush.bf16.msra.mxu0 %v514
    %554 = vmatpush.bf16.msra.mxu0 %v513
    %555 = vmatpush.bf16.msra.mxu0 %v512
    %556 = vmatpush.bf16.msra.mxu0 %v511
    %557 = vmatmul.bf16.gmra.mxu0 %v219
    %v558 = vpop.f32.mrf.mxu0
    %v559 = vadd.f32 %v545, %v558
    %v560 = vpop.f32.mrf.mxu0
    %v561 = vadd.f32 %v547, %v560
    %562 = vdwg.mxu0
    %v563 = vld [vmem:[#allocation3 + $0xb] sm:$0xff]
    %v564 = vld [vmem:[#allocation3 + $0xc] sm:$0xff]
    %v565 = vld [vmem:[#allocation3 + $0xd] sm:$0xff]
    %v566 = vld [vmem:[#allocation3 + $0xe] sm:$0xff]
    %568 = vrot.lane.b32.xlu0 %v564, 64
    %v569 = vpop.permute.xlu0 %568
    %572 = vrot.lane.b32.xlu0 %v566, 64
    %v573 = vpop.permute.xlu0 %572
    %v575 = vsel %vm161, %v563, %v569
    %v576 = vsel %vm161, %v565, %v573
    %v577 = vld [vmem:[#allocation3 + $0x23] sm:$0xff]
    %v578 = vld [vmem:[#allocation3 + $0x24] sm:$0xff]
    %v579 = vld [vmem:[#allocation3 + $0x25] sm:$0xff]
    %v580 = vld [vmem:[#allocation3 + $0x26] sm:$0xff]
    %582 = vrot.lane.b32.xlu0 %v578, 64
    %v583 = vpop.permute.xlu0 %582
    %586 = vrot.lane.b32.xlu0 %v580, 64
    %v587 = vpop.permute.xlu0 %586
    %v589 = vsel %vm161, %v577, %v583
    %v590 = vsel %vm161, %v579, %v587
    %v591 = vpack.c.bf16 %v589, %v575
    %v592 = vpack.c.bf16 %v590, %v576
    %s593 = scalar_lea.vmem %s3, 256
    %v594 = vld [vmem:[%s593] sm:$0xf]
    %v595 = vld [vmem:[%s593 + $0x4] sm:$0xf]
    %v596 = vld [vmem:[%s593 + $0x8] sm:$0xf]
    %v597 = vld [vmem:[%s593 + $0xc] sm:$0xf]
    %v598 = vld [vmem:[%s593 + $0x10] sm:$0xf]
    %v599 = vld [vmem:[%s593 + $0x14] sm:$0xf]
    %v600 = vld [vmem:[%s593 + $0x18] sm:$0xf]
    %v601 = vld [vmem:[%s593 + $0x1c] sm:$0xf]
    %v602 = vld [vmem:[%s593 + $0x20] sm:$0xf]
    %v603 = vld [vmem:[%s593 + $0x24] sm:$0xf]
    %v604 = vld [vmem:[%s593 + $0x28] sm:$0xf]
    %v605 = vld [vmem:[%s593 + $0x2c] sm:$0xf]
    %v606 = vld [vmem:[%s593 + $0x30] sm:$0xf]
    %v607 = vld [vmem:[%s593 + $0x34] sm:$0xf]
    %v608 = vld [vmem:[%s593 + $0x38] sm:$0xf]
    %v609 = vld [vmem:[%s593 + $0x3c] sm:$0xf]
    %v610 = vld [vmem:[%s593 + $0x40] sm:$0xf]
    %v611 = vld [vmem:[%s593 + $0x44] sm:$0xf]
    %v612 = vld [vmem:[%s593 + $0x48] sm:$0xf]
    %v613 = vld [vmem:[%s593 + $0x4c] sm:$0xf]
    %v614 = vld [vmem:[%s593 + $0x50] sm:$0xf]
    %v615 = vld [vmem:[%s593 + $0x54] sm:$0xf]
    %v616 = vld [vmem:[%s593 + $0x58] sm:$0xf]
    %v617 = vld [vmem:[%s593 + $0x5c] sm:$0xf]
    %v618 = vld [vmem:[%s593 + $0x60] sm:$0xf]
    %v619 = vld [vmem:[%s593 + $0x64] sm:$0xf]
    %v620 = vld [vmem:[%s593 + $0x68] sm:$0xf]
    %v621 = vld [vmem:[%s593 + $0x6c] sm:$0xf]
    %v622 = vld [vmem:[%s593 + $0x70] sm:$0xf]
    %v623 = vld [vmem:[%s593 + $0x74] sm:$0xf]
    %v624 = vld [vmem:[%s593 + $0x78] sm:$0xf]
    %v625 = vld [vmem:[%s593 + $0x7c] sm:$0xf]
    %v658 = vunpack.c.l.b16 %v594
    %v659 = vunpack.c.l.b16 %v595
    %v660 = vunpack.c.l.b16 %v596
    %v661 = vunpack.c.l.b16 %v597
    %v662 = vunpack.c.l.b16 %v598
    %v663 = vunpack.c.l.b16 %v599
    %v664 = vunpack.c.l.b16 %v600
    %v665 = vunpack.c.l.b16 %v601
    %v666 = vunpack.c.l.b16 %v602
    %v667 = vunpack.c.l.b16 %v603
    %v668 = vunpack.c.l.b16 %v604
    %v669 = vunpack.c.l.b16 %v605
    %v670 = vunpack.c.l.b16 %v606
    %v671 = vunpack.c.l.b16 %v607
    %v672 = vunpack.c.l.b16 %v608
    %v673 = vunpack.c.l.b16 %v609
    %v674 = vunpack.c.l.b16 %v610
    %v675 = vunpack.c.l.b16 %v611
    %v676 = vunpack.c.l.b16 %v612
    %v677 = vunpack.c.l.b16 %v613
    %v678 = vunpack.c.l.b16 %v614
    %v679 = vunpack.c.l.b16 %v615
    %v680 = vunpack.c.l.b16 %v616
    %v681 = vunpack.c.l.b16 %v617
    %v682 = vunpack.c.l.b16 %v618
    %v683 = vunpack.c.l.b16 %v619
    %v684 = vunpack.c.l.b16 %v620
    %v685 = vunpack.c.l.b16 %v621
    %v686 = vunpack.c.l.b16 %v622
    %v687 = vunpack.c.l.b16 %v623
    %v688 = vunpack.c.l.b16 %v624
    %v689 = vunpack.c.l.b16 %v625
    %v690 = vpack.c.b16 %v659, %v658
    %v691 = vpack.c.b16 %v661, %v660
    %v692 = vpack.c.b16 %v663, %v662
    %v693 = vpack.c.b16 %v665, %v664
    %v694 = vpack.c.b16 %v667, %v666
    %v695 = vpack.c.b16 %v669, %v668
    %v696 = vpack.c.b16 %v671, %v670
    %v697 = vpack.c.b16 %v673, %v672
    %v698 = vpack.c.b16 %v675, %v674
    %v699 = vpack.c.b16 %v677, %v676
    %v700 = vpack.c.b16 %v679, %v678
    %v701 = vpack.c.b16 %v681, %v680
    %v702 = vpack.c.b16 %v683, %v682
    %v703 = vpack.c.b16 %v685, %v684
    %v704 = vpack.c.b16 %v687, %v686
    %v705 = vpack.c.b16 %v689, %v688
    %722 = vmatpush.bf16.msra.mxu0 %v697
    %723 = vmatpush.bf16.msra.mxu0 %v696
    %724 = vmatpush.bf16.msra.mxu0 %v695
    %725 = vmatpush.bf16.msra.mxu0 %v694
    %726 = vmatpush.bf16.msra.mxu0 %v693
    %727 = vmatpush.bf16.msra.mxu0 %v692
    %728 = vmatpush.bf16.msra.mxu0 %v691
    %729 = vmatpush.bf16.msra.mxu0 %v690
    %730 = vmatmul.bf16.gmra.mxu0 %v591
    %v731 = vpop.f32.mrf.mxu0
    %v732 = vadd.f32 0.0, %v731
    %v733 = vpop.f32.mrf.mxu0
    %v734 = vadd.f32 0.0, %v733
    %735 = vdwg.mxu0
    %736 = vmatpush.bf16.msra.mxu0 %v705
    %737 = vmatpush.bf16.msra.mxu0 %v704
    %738 = vmatpush.bf16.msra.mxu0 %v703
    %739 = vmatpush.bf16.msra.mxu0 %v702
    %740 = vmatpush.bf16.msra.mxu0 %v701
    %741 = vmatpush.bf16.msra.mxu0 %v700
    %742 = vmatpush.bf16.msra.mxu0 %v699
    %743 = vmatpush.bf16.msra.mxu0 %v698
    %744 = vmatmul.bf16.gmra.mxu0 %v592
    %v745 = vpop.f32.mrf.mxu0
    %v746 = vadd.f32 %v732, %v745
    %v747 = vpop.f32.mrf.mxu0
    %v748 = vadd.f32 %v734, %v747
    %749 = vdwg.mxu0
    %v750 = vadd.f32 %v559, %v746
    %v751 = vadd.f32 %v561, %v748
    %v752 = vld [vmem:[%s4] sm:$0x1]
    %v754 = vperm.slane %v752, 0
    %v756 = vadd.f32 %v750, %v754
    %v757 = vadd.f32 %v751, %v754
    %v758 = vmax.f32 %v756, 0.0
    %v759 = vmax.f32 %v757, 0.0
    %760 = vst.msk [vmem:[#allocation4] sm:$0xff] %vm161, 0.0
    %761 = vst.msk [vmem:[#allocation4 + $0x8] sm:$0xff] %vm161, %v758
    %s762 = scalar_lea.vmem [#allocation4], 7
    %v763 = vld [vmem:[%s762] ss:$2 sm:$0xf]
    %s764 = scalar_lea.vmem [#allocation4], 8
    %v765 = vld [vmem:[%s764] ss:$2 sm:$0xf]
    %s766 = scalar_lea.vmem [#allocation4], 9
    %v767 = vld [vmem:[%s766] ss:$2 sm:$0xf]
    %v768 = vmax.f32 %v763, %v765
    %v769 = vmax.f32 %v768, %v767
    %770 = vst.msk [vmem:[#allocation5] sm:$0xff] %vm161, 0.0
    %vm771 = vcmask 1043456
    %v772 = vsel %vm771, %v769, 0.0
    %773 = vst.msk [vmem:[#allocation5 + $0x8] sm:$0xff] %vm161, %v772
    %774 = vst.msk [vmem:[#allocation5 + $0x10] sm:$0xff] %vm161, 0.0
    %775 = vst.msk [vmem:[#allocation4 + $0x18] sm:$0xff] %vm161, 0.0
    %776 = vst.msk [vmem:[#allocation4 + $0x20] sm:$0xff] %vm161, %v759
    %s777 = scalar_lea.vmem [#allocation4], 31
    %v778 = vld [vmem:[%s777] ss:$2 sm:$0xf]
    %s779 = scalar_lea.vmem [#allocation4], 32
    %v780 = vld [vmem:[%s779] ss:$2 sm:$0xf]
    %s781 = scalar_lea.vmem [#allocation4], 33
    %v782 = vld [vmem:[%s781] ss:$2 sm:$0xf]
    %v783 = vmax.f32 %v778, %v780
    %v784 = vmax.f32 %v783, %v782
    %785 = vst.msk [vmem:[#allocation5 + $0x18] sm:$0xff] %vm161, 0.0
    %v786 = vsel %vm771, %v784, 0.0
    %787 = vst.msk [vmem:[#allocation5 + $0x20] sm:$0xff] %vm161, %v786
    %788 = vst.msk [vmem:[#allocation5 + $0x28] sm:$0xff] %vm161, 0.0
    %v789 = vld [vmem:[#allocation5 + $0x6] sm:$0xf]
    %v790 = vld [vmem:[#allocation5 + $0x7] sm:$0xf]
    %v791 = vld [vmem:[#allocation5 + $0x8] sm:$0xf]
    %v792 = vld [vmem:[#allocation5 + $0x9] sm:$0xf]
    %794 = vrot.lane.b32.xlu0 %v790, 64
    %v795 = vpop.permute.xlu0 %794
    %798 = vrot.lane.b32.xlu0 %v792, 64
    %v799 = vpop.permute.xlu0 %798
    %v801 = vsel %vm161, %v789, %v795
    %v802 = vsel %vm161, %v791, %v799
    %v803 = vld [vmem:[#allocation5 + $0x1e] sm:$0xf]
    %v804 = vld [vmem:[#allocation5 + $0x1f] sm:$0xf]
    %v805 = vld [vmem:[#allocation5 + $0x20] sm:$0xf]
    %v806 = vld [vmem:[#allocation5 + $0x21] sm:$0xf]
    %808 = vrot.lane.b32.xlu0 %v804, 64
    %v809 = vpop.permute.xlu0 %808
    %812 = vrot.lane.b32.xlu0 %v806, 64
    %v813 = vpop.permute.xlu0 %812
    %v815 = vsel %vm161, %v803, %v809
    %v816 = vsel %vm161, %v805, %v813
    %v819 = vrot.slane %v815, 4
    %v820 = vrot.slane %v816, 4
    %v823 = vsel %vm771, %v801, %v819
    %v824 = vsel %vm771, %v802, %v820
    %v825 = vpack.c.bf16 %v823, %v823
    %v826 = vpack.c.bf16 %v824, %v824
    %v827 = vld [vmem:[%s5] sm:$0xf]
    %v828 = vld [vmem:[%s5 + $0x4] sm:$0xf]
    %v829 = vld [vmem:[%s5 + $0x8] sm:$0xf]
    %v830 = vld [vmem:[%s5 + $0xc] sm:$0xf]
    %v831 = vld [vmem:[%s5 + $0x10] sm:$0xf]
    %v832 = vld [vmem:[%s5 + $0x14] sm:$0xf]
    %v833 = vld [vmem:[%s5 + $0x18] sm:$0xf]
    %v834 = vld [vmem:[%s5 + $0x1c] sm:$0xf]
    %v835 = vld [vmem:[%s5 + $0x20] sm:$0xf]
    %v836 = vld [vmem:[%s5 + $0x24] sm:$0xf]
    %v837 = vld [vmem:[%s5 + $0x28] sm:$0xf]
    %v838 = vld [vmem:[%s5 + $0x2c] sm:$0xf]
    %v839 = vld [vmem:[%s5 + $0x30] sm:$0xf]
    %v840 = vld [vmem:[%s5 + $0x34] sm:$0xf]
    %v841 = vld [vmem:[%s5 + $0x38] sm:$0xf]
    %v842 = vld [vmem:[%s5 + $0x3c] sm:$0xf]
    %v843 = vld [vmem:[%s5 + $0x40] sm:$0xf]
    %v844 = vld [vmem:[%s5 + $0x44] sm:$0xf]
    %v845 = vld [vmem:[%s5 + $0x48] sm:$0xf]
    %v846 = vld [vmem:[%s5 + $0x4c] sm:$0xf]
    %v847 = vld [vmem:[%s5 + $0x50] sm:$0xf]
    %v848 = vld [vmem:[%s5 + $0x54] sm:$0xf]
    %v849 = vld [vmem:[%s5 + $0x58] sm:$0xf]
    %v850 = vld [vmem:[%s5 + $0x5c] sm:$0xf]
    %v851 = vld [vmem:[%s5 + $0x60] sm:$0xf]
    %v852 = vld [vmem:[%s5 + $0x64] sm:$0xf]
    %v853 = vld [vmem:[%s5 + $0x68] sm:$0xf]
    %v854 = vld [vmem:[%s5 + $0x6c] sm:$0xf]
    %v855 = vld [vmem:[%s5 + $0x70] sm:$0xf]
    %v856 = vld [vmem:[%s5 + $0x74] sm:$0xf]
    %v857 = vld [vmem:[%s5 + $0x78] sm:$0xf]
    %v858 = vld [vmem:[%s5 + $0x7c] sm:$0xf]
    %v859 = vld [vmem:[#allocation5 + $0xa] sm:$0xf]
    %v860 = vld [vmem:[#allocation5 + $0xb] sm:$0xf]
    %v861 = vld [vmem:[#allocation5 + $0xc] sm:$0xf]
    %v862 = vld [vmem:[#allocation5 + $0xd] sm:$0xf]
    %864 = vrot.lane.b32.xlu0 %v860, 64
    %v865 = vpop.permute.xlu0 %864
    %868 = vrot.lane.b32.xlu0 %v862, 64
    %v869 = vpop.permute.xlu0 %868
    %v871 = vsel %vm161, %v859, %v865
    %v872 = vsel %vm161, %v861, %v869
    %v873 = vld [vmem:[#allocation5 + $0x22] sm:$0xf]
    %v874 = vld [vmem:[#allocation5 + $0x23] sm:$0xf]
    %v875 = vld [vmem:[#allocation5 + $0x24] sm:$0xf]
    %v876 = vld [vmem:[#allocation5 + $0x25] sm:$0xf]
    %878 = vrot.lane.b32.xlu0 %v874, 64
    %v879 = vpop.permute.xlu0 %878
    %882 = vrot.lane.b32.xlu0 %v876, 64
    %v883 = vpop.permute.xlu0 %882
    %v885 = vsel %vm161, %v873, %v879
    %v886 = vsel %vm161, %v875, %v883
    %v889 = vrot.slane %v885, 4
    %v890 = vrot.slane %v886, 4
    %v893 = vsel %vm771, %v871, %v889
    %v894 = vsel %vm771, %v872, %v890
    %v895 = vpack.c.bf16 %v893, %v893
    %v896 = vpack.c.bf16 %v894, %v894
    %s897 = scalar_lea.vmem %s5, 128
    %v898 = vld [vmem:[%s897] sm:$0xf]
    %v899 = vld [vmem:[%s897 + $0x4] sm:$0xf]
    %v900 = vld [vmem:[%s897 + $0x8] sm:$0xf]
    %v901 = vld [vmem:[%s897 + $0xc] sm:$0xf]
    %v902 = vld [vmem:[%s897 + $0x10] sm:$0xf]
    %v903 = vld [vmem:[%s897 + $0x14] sm:$0xf]
    %v904 = vld [vmem:[%s897 + $0x18] sm:$0xf]
    %v905 = vld [vmem:[%s897 + $0x1c] sm:$0xf]
    %v906 = vld [vmem:[%s897 + $0x20] sm:$0xf]
    %v907 = vld [vmem:[%s897 + $0x24] sm:$0xf]
    %v908 = vld [vmem:[%s897 + $0x28] sm:$0xf]
    %v909 = vld [vmem:[%s897 + $0x2c] sm:$0xf]
    %v910 = vld [vmem:[%s897 + $0x30] sm:$0xf]
    %v911 = vld [vmem:[%s897 + $0x34] sm:$0xf]
    %v912 = vld [vmem:[%s897 + $0x38] sm:$0xf]
    %v913 = vld [vmem:[%s897 + $0x3c] sm:$0xf]
    %v914 = vld [vmem:[%s897 + $0x40] sm:$0xf]
    %v915 = vld [vmem:[%s897 + $0x44] sm:$0xf]
    %v916 = vld [vmem:[%s897 + $0x48] sm:$0xf]
    %v917 = vld [vmem:[%s897 + $0x4c] sm:$0xf]
    %v918 = vld [vmem:[%s897 + $0x50] sm:$0xf]
    %v919 = vld [vmem:[%s897 + $0x54] sm:$0xf]
    %v920 = vld [vmem:[%s897 + $0x58] sm:$0xf]
    %v921 = vld [vmem:[%s897 + $0x5c] sm:$0xf]
    %v922 = vld [vmem:[%s897 + $0x60] sm:$0xf]
    %v923 = vld [vmem:[%s897 + $0x64] sm:$0xf]
    %v924 = vld [vmem:[%s897 + $0x68] sm:$0xf]
    %v925 = vld [vmem:[%s897 + $0x6c] sm:$0xf]
    %v926 = vld [vmem:[%s897 + $0x70] sm:$0xf]
    %v927 = vld [vmem:[%s897 + $0x74] sm:$0xf]
    %v928 = vld [vmem:[%s897 + $0x78] sm:$0xf]
    %v929 = vld [vmem:[%s897 + $0x7c] sm:$0xf]
    %v962 = vunpack.c.l.b16 %v898
    %v963 = vunpack.c.l.b16 %v899
    %v964 = vunpack.c.l.b16 %v900
    %v965 = vunpack.c.l.b16 %v901
    %v966 = vunpack.c.l.b16 %v902
    %v967 = vunpack.c.l.b16 %v903
    %v968 = vunpack.c.l.b16 %v904
    %v969 = vunpack.c.l.b16 %v905
    %v970 = vunpack.c.l.b16 %v906
    %v971 = vunpack.c.l.b16 %v907
    %v972 = vunpack.c.l.b16 %v908
    %v973 = vunpack.c.l.b16 %v909
    %v974 = vunpack.c.l.b16 %v910
    %v975 = vunpack.c.l.b16 %v911
    %v976 = vunpack.c.l.b16 %v912
    %v977 = vunpack.c.l.b16 %v913
    %v978 = vunpack.c.l.b16 %v914
    %v979 = vunpack.c.l.b16 %v915
    %v980 = vunpack.c.l.b16 %v916
    %v981 = vunpack.c.l.b16 %v917
    %v982 = vunpack.c.l.b16 %v918
    %v983 = vunpack.c.l.b16 %v919
    %v984 = vunpack.c.l.b16 %v920
    %v985 = vunpack.c.l.b16 %v921
    %v986 = vunpack.c.l.b16 %v922
    %v987 = vunpack.c.l.b16 %v923
    %v988 = vunpack.c.l.b16 %v924
    %v989 = vunpack.c.l.b16 %v925
    %v990 = vunpack.c.l.b16 %v926
    %v991 = vunpack.c.l.b16 %v927
    %v992 = vunpack.c.l.b16 %v928
    %v993 = vunpack.c.l.b16 %v929
    %v994 = vpack.c.b16 %v963, %v962
    %v995 = vpack.c.b16 %v965, %v964
    %v996 = vpack.c.b16 %v967, %v966
    %v997 = vpack.c.b16 %v969, %v968
    %v998 = vpack.c.b16 %v971, %v970
    %v999 = vpack.c.b16 %v973, %v972
    %v1000 = vpack.c.b16 %v975, %v974
    %v1001 = vpack.c.b16 %v977, %v976
    %v1002 = vpack.c.b16 %v979, %v978
    %v1003 = vpack.c.b16 %v981, %v980
    %v1004 = vpack.c.b16 %v983, %v982
    %v1005 = vpack.c.b16 %v985, %v984
    %v1006 = vpack.c.b16 %v987, %v986
    %v1007 = vpack.c.b16 %v989, %v988
    %v1008 = vpack.c.b16 %v991, %v990
    %v1009 = vpack.c.b16 %v993, %v992
    %1026 = vmatpush.bf16.msra.mxu0 %v1001
    %1027 = vmatpush.bf16.msra.mxu0 %v1000
    %1028 = vmatpush.bf16.msra.mxu0 %v999
    %1029 = vmatpush.bf16.msra.mxu0 %v998
    %1030 = vmatpush.bf16.msra.mxu0 %v997
    %1031 = vmatpush.bf16.msra.mxu0 %v996
    %1032 = vmatpush.bf16.msra.mxu0 %v995
    %1033 = vmatpush.bf16.msra.mxu0 %v994
    %1034 = vmatmul.bf16.gmra.mxu0 %v895
    %v1035 = vpop.f32.mrf.mxu0
    %v1036 = vadd.f32 0.0, %v1035
    %v1037 = vpop.f32.mrf.mxu0
    %1038 = vdwg.mxu0
    %1039 = vmatpush.bf16.msra.mxu0 %v1009
    %1040 = vmatpush.bf16.msra.mxu0 %v1008
    %1041 = vmatpush.bf16.msra.mxu0 %v1007
    %1042 = vmatpush.bf16.msra.mxu0 %v1006
    %1043 = vmatpush.bf16.msra.mxu0 %v1005
    %1044 = vmatpush.bf16.msra.mxu0 %v1004
    %1045 = vmatpush.bf16.msra.mxu0 %v1003
    %1046 = vmatpush.bf16.msra.mxu0 %v1002
    %1047 = vmatmul.bf16.gmra.mxu0 %v896
    %v1048 = vpop.f32.mrf.mxu0
    %v1049 = vadd.f32 %v1036, %v1048
    %v1050 = vpop.f32.mrf.mxu0
    %1051 = vdwg.mxu0
    %v1084 = vunpack.c.l.b16 %v827
    %v1085 = vunpack.c.l.b16 %v828
    %v1086 = vunpack.c.l.b16 %v829
    %v1087 = vunpack.c.l.b16 %v830
    %v1088 = vunpack.c.l.b16 %v831
    %v1089 = vunpack.c.l.b16 %v832
    %v1090 = vunpack.c.l.b16 %v833
    %v1091 = vunpack.c.l.b16 %v834
    %v1092 = vunpack.c.l.b16 %v835
    %v1093 = vunpack.c.l.b16 %v836
    %v1094 = vunpack.c.l.b16 %v837
    %v1095 = vunpack.c.l.b16 %v838
    %v1096 = vunpack.c.l.b16 %v839
    %v1097 = vunpack.c.l.b16 %v840
    %v1098 = vunpack.c.l.b16 %v841
    %v1099 = vunpack.c.l.b16 %v842
    %v1100 = vunpack.c.l.b16 %v843
    %v1101 = vunpack.c.l.b16 %v844
    %v1102 = vunpack.c.l.b16 %v845
    %v1103 = vunpack.c.l.b16 %v846
    %v1104 = vunpack.c.l.b16 %v847
    %v1105 = vunpack.c.l.b16 %v848
    %v1106 = vunpack.c.l.b16 %v849
    %v1107 = vunpack.c.l.b16 %v850
    %v1108 = vunpack.c.l.b16 %v851
    %v1109 = vunpack.c.l.b16 %v852
    %v1110 = vunpack.c.l.b16 %v853
    %v1111 = vunpack.c.l.b16 %v854
    %v1112 = vunpack.c.l.b16 %v855
    %v1113 = vunpack.c.l.b16 %v856
    %v1114 = vunpack.c.l.b16 %v857
    %v1115 = vunpack.c.l.b16 %v858
    %v1116 = vpack.c.b16 %v1085, %v1084
    %v1117 = vpack.c.b16 %v1087, %v1086
    %v1118 = vpack.c.b16 %v1089, %v1088
    %v1119 = vpack.c.b16 %v1091, %v1090
    %v1120 = vpack.c.b16 %v1093, %v1092
    %v1121 = vpack.c.b16 %v1095, %v1094
    %v1122 = vpack.c.b16 %v1097, %v1096
    %v1123 = vpack.c.b16 %v1099, %v1098
    %v1124 = vpack.c.b16 %v1101, %v1100
    %v1125 = vpack.c.b16 %v1103, %v1102
    %v1126 = vpack.c.b16 %v1105, %v1104
    %v1127 = vpack.c.b16 %v1107, %v1106
    %v1128 = vpack.c.b16 %v1109, %v1108
    %v1129 = vpack.c.b16 %v1111, %v1110
    %v1130 = vpack.c.b16 %v1113, %v1112
    %v1131 = vpack.c.b16 %v1115, %v1114
    %1148 = vmatpush.bf16.msra.mxu0 %v1123
    %1149 = vmatpush.bf16.msra.mxu0 %v1122
    %1150 = vmatpush.bf16.msra.mxu0 %v1121
    %1151 = vmatpush.bf16.msra.mxu0 %v1120
    %1152 = vmatpush.bf16.msra.mxu0 %v1119
    %1153 = vmatpush.bf16.msra.mxu0 %v1118
    %1154 = vmatpush.bf16.msra.mxu0 %v1117
    %1155 = vmatpush.bf16.msra.mxu0 %v1116
    %1156 = vmatmul.bf16.gmra.mxu0 %v825
    %v1157 = vpop.f32.mrf.mxu0
    %v1158 = vadd.f32 %v1049, %v1157
    %v1159 = vpop.f32.mrf.mxu0
    %1160 = vdwg.mxu0
    %1161 = vmatpush.bf16.msra.mxu0 %v1131
    %1162 = vmatpush.bf16.msra.mxu0 %v1130
    %1163 = vmatpush.bf16.msra.mxu0 %v1129
    %1164 = vmatpush.bf16.msra.mxu0 %v1128
    %1165 = vmatpush.bf16.msra.mxu0 %v1127
    %1166 = vmatpush.bf16.msra.mxu0 %v1126
    %1167 = vmatpush.bf16.msra.mxu0 %v1125
    %1168 = vmatpush.bf16.msra.mxu0 %v1124
    %1169 = vmatmul.bf16.gmra.mxu0 %v826
    %v1170 = vpop.f32.mrf.mxu0
    %v1171 = vadd.f32 %v1158, %v1170
    %v1172 = vpop.f32.mrf.mxu0
    %1173 = vdwg.mxu0
    %v1174 = vld [vmem:[%s6] sm:$0x1]
    %v1176 = vperm.slane %v1174, 0
    %v1178 = vadd.f32 %v1171, %v1176
    %v1179 = vmax.f32 %v1178, 0.0
    %1180 = vst.msk [vmem:[#allocation6] sm:$0xff] %vm161, 0.0
    %v1181 = vsel %vm771, %v1179, 0.0
    %1182 = vst.msk [vmem:[#allocation6 + $0x8] sm:$0xff] %vm161, %v1181
    %s1183 = scalar_lea.vmem [#allocation6], 7
    %v1184 = vld [vmem:[%s1183] ss:$2 sm:$0x3]
    %s1185 = scalar_lea.vmem [#allocation6], 8
    %v1186 = vld [vmem:[%s1185] ss:$2 sm:$0x3]
    %s1187 = scalar_lea.vmem [#allocation6], 9
    %v1188 = vld [vmem:[%s1187] ss:$2 sm:$0x3]
    %v1189 = vmax.f32 %v1184, %v1186
    %v1190 = vmax.f32 %v1189, %v1188
    %v1192 = vrot.slane %v1190, 1
    %1193 = vrot.lane.b32.xlu0 %v1192, 64
    %v1194 = vpop.permute.xlu0 %1193
    %v1196 = vsel %vm161, %v1190, %v1194
    %1197 = vst.msk [vmem:[#allocation6 + $0x18] sm:$0xff] %vm161, 0.0
    %v1199 = vrot.slane %v1179, 4
    %v1201 = vsel %vm771, %v1199, 0.0
    %1202 = vst.msk [vmem:[#allocation6 + $0x20] sm:$0xff] %vm161, %v1201
    %s1203 = scalar_lea.vmem [#allocation6], 31
    %v1204 = vld [vmem:[%s1203] ss:$2 sm:$0x3]
    %s1205 = scalar_lea.vmem [#allocation6], 32
    %v1206 = vld [vmem:[%s1205] ss:$2 sm:$0x3]
    %s1207 = scalar_lea.vmem [#allocation6], 33
    %v1208 = vld [vmem:[%s1207] ss:$2 sm:$0x3]
    %v1209 = vmax.f32 %v1204, %v1206
    %v1210 = vmax.f32 %v1209, %v1208
    %v1212 = vrot.slane %v1210, 1
    %1213 = vrot.lane.b32.xlu0 %v1212, 64
    %v1214 = vpop.permute.xlu0 %1213
    %v1216 = vsel %vm161, %v1210, %v1214
    %v1218 = vrot.slane %v1216, 7
    %vm1220 = vcmask 1040384
    %v1221 = vsel %vm1220, %v1196, %v1218
    %v1222 = vpack.c.bf16 %v1221, %v1221
    %v1223 = vld [vmem:[%s7] sm:$0xff]
    %v1224 = vld [vmem:[%s7 + $0x8] sm:$0xff]
    %v1225 = vld [vmem:[%s7 + $0x10] sm:$0xff]
    %v1226 = vld [vmem:[%s7 + $0x18] sm:$0xff]
    %v1227 = vld [vmem:[%s7 + $0x20] sm:$0xff]
    %v1228 = vld [vmem:[%s7 + $0x28] sm:$0xff]
    %v1229 = vld [vmem:[%s7 + $0x30] sm:$0xff]
    %v1230 = vld [vmem:[%s7 + $0x38] sm:$0xff]
    %v1231 = vld [vmem:[%s7 + $0x40] sm:$0xff]
    %v1232 = vld [vmem:[%s7 + $0x48] sm:$0xff]
    %v1233 = vld [vmem:[%s7 + $0x50] sm:$0xff]
    %v1234 = vld [vmem:[%s7 + $0x58] sm:$0xff]
    %v1235 = vld [vmem:[%s7 + $0x60] sm:$0xff]
    %v1236 = vld [vmem:[%s7 + $0x68] sm:$0xff]
    %v1237 = vld [vmem:[%s7 + $0x70] sm:$0xff]
    %v1238 = vld [vmem:[%s7 + $0x78] sm:$0xff]
    %v1239 = vld [vmem:[%s7 + $0x80] sm:$0xff]
    %v1240 = vld [vmem:[%s7 + $0x88] sm:$0xff]
    %v1241 = vld [vmem:[%s7 + $0x90] sm:$0xff]
    %v1242 = vld [vmem:[%s7 + $0x98] sm:$0xff]
    %v1243 = vld [vmem:[%s7 + $0xa0] sm:$0xff]
    %v1244 = vld [vmem:[%s7 + $0xa8] sm:$0xff]
    %v1245 = vld [vmem:[%s7 + $0xb0] sm:$0xff]
    %v1246 = vld [vmem:[%s7 + $0xb8] sm:$0xff]
    %v1247 = vld [vmem:[%s7 + $0xc0] sm:$0xff]
    %v1248 = vld [vmem:[%s7 + $0xc8] sm:$0xff]
    %v1249 = vld [vmem:[%s7 + $0xd0] sm:$0xff]
    %v1250 = vld [vmem:[%s7 + $0xd8] sm:$0xff]
    %v1251 = vld [vmem:[%s7 + $0xe0] sm:$0xff]
    %v1252 = vld [vmem:[%s7 + $0xe8] sm:$0xff]
    %v1253 = vld [vmem:[%s7 + $0xf0] sm:$0xff]
    %v1254 = vld [vmem:[%s7 + $0xf8] sm:$0xff]
    %v1255 = vld [vmem:[%s8] sm:$0xf]
    %v1257 = vperm.slane %v1255, 0
    %v1258 = vperm.slane %v1255, 1
    %v1259 = vperm.slane %v1255, 2
    %v1260 = vperm.slane %v1255, 3
    %v1297 = vunpack.c.l.b16 %v1223
    %v1298 = vunpack.c.h.b16 %v1223
    %v1299 = vunpack.c.l.b16 %v1224
    %v1300 = vunpack.c.h.b16 %v1224
    %v1301 = vunpack.c.l.b16 %v1225
    %v1302 = vunpack.c.h.b16 %v1225
    %v1303 = vunpack.c.l.b16 %v1226
    %v1304 = vunpack.c.h.b16 %v1226
    %v1305 = vunpack.c.l.b16 %v1227
    %v1306 = vunpack.c.h.b16 %v1227
    %v1307 = vunpack.c.l.b16 %v1228
    %v1308 = vunpack.c.h.b16 %v1228
    %v1309 = vunpack.c.l.b16 %v1229
    %v1310 = vunpack.c.h.b16 %v1229
    %v1311 = vunpack.c.l.b16 %v1230
    %v1312 = vunpack.c.h.b16 %v1230
    %v1313 = vunpack.c.l.b16 %v1231
    %v1314 = vunpack.c.h.b16 %v1231
    %v1315 = vunpack.c.l.b16 %v1232
    %v1316 = vunpack.c.h.b16 %v1232
    %v1317 = vunpack.c.l.b16 %v1233
    %v1318 = vunpack.c.h.b16 %v1233
    %v1319 = vunpack.c.l.b16 %v1234
    %v1320 = vunpack.c.h.b16 %v1234
    %v1321 = vunpack.c.l.b16 %v1235
    %v1322 = vunpack.c.h.b16 %v1235
    %v1323 = vunpack.c.l.b16 %v1236
    %v1324 = vunpack.c.h.b16 %v1236
    %v1325 = vunpack.c.l.b16 %v1237
    %v1326 = vunpack.c.h.b16 %v1237
    %v1327 = vunpack.c.l.b16 %v1238
    %v1328 = vunpack.c.h.b16 %v1238
    %v1329 = vunpack.c.l.b16 %v1239
    %v1330 = vunpack.c.h.b16 %v1239
    %v1331 = vunpack.c.l.b16 %v1240
    %v1332 = vunpack.c.h.b16 %v1240
    %v1333 = vunpack.c.l.b16 %v1241
    %v1334 = vunpack.c.h.b16 %v1241
    %v1335 = vunpack.c.l.b16 %v1242
    %v1336 = vunpack.c.h.b16 %v1242
    %v1337 = vunpack.c.l.b16 %v1243
    %v1338 = vunpack.c.h.b16 %v1243
    %v1339 = vunpack.c.l.b16 %v1244
    %v1340 = vunpack.c.h.b16 %v1244
    %v1341 = vunpack.c.l.b16 %v1245
    %v1342 = vunpack.c.h.b16 %v1245
    %v1343 = vunpack.c.l.b16 %v1246
    %v1344 = vunpack.c.h.b16 %v1246
    %v1345 = vunpack.c.l.b16 %v1247
    %v1346 = vunpack.c.h.b16 %v1247
    %v1347 = vunpack.c.l.b16 %v1248
    %v1348 = vunpack.c.h.b16 %v1248
    %v1349 = vunpack.c.l.b16 %v1249
    %v1350 = vunpack.c.h.b16 %v1249
    %v1351 = vunpack.c.l.b16 %v1250
    %v1352 = vunpack.c.h.b16 %v1250
    %v1353 = vunpack.c.l.b16 %v1251
    %v1354 = vunpack.c.h.b16 %v1251
    %v1355 = vunpack.c.l.b16 %v1252
    %v1356 = vunpack.c.h.b16 %v1252
    %v1357 = vunpack.c.l.b16 %v1253
    %v1358 = vunpack.c.h.b16 %v1253
    %v1359 = vunpack.c.l.b16 %v1254
    %v1360 = vunpack.c.h.b16 %v1254
    %v1361 = vpack.c.b16 %v1301, %v1297
    %v1362 = vpack.c.b16 %v1302, %v1298
    %v1363 = vpack.c.b16 %v1303, %v1299
    %v1364 = vpack.c.b16 %v1304, %v1300
    %v1365 = vpack.c.b16 %v1309, %v1305
    %v1366 = vpack.c.b16 %v1310, %v1306
    %v1367 = vpack.c.b16 %v1311, %v1307
    %v1368 = vpack.c.b16 %v1312, %v1308
    %v1369 = vpack.c.b16 %v1317, %v1313
    %v1370 = vpack.c.b16 %v1318, %v1314
    %v1371 = vpack.c.b16 %v1319, %v1315
    %v1372 = vpack.c.b16 %v1320, %v1316
    %v1373 = vpack.c.b16 %v1325, %v1321
    %v1374 = vpack.c.b16 %v1326, %v1322
    %v1375 = vpack.c.b16 %v1327, %v1323
    %v1376 = vpack.c.b16 %v1328, %v1324
    %v1377 = vpack.c.b16 %v1333, %v1329
    %v1378 = vpack.c.b16 %v1334, %v1330
    %v1379 = vpack.c.b16 %v1335, %v1331
    %v1380 = vpack.c.b16 %v1336, %v1332
    %v1381 = vpack.c.b16 %v1341, %v1337
    %v1382 = vpack.c.b16 %v1342, %v1338
    %v1383 = vpack.c.b16 %v1343, %v1339
    %v1384 = vpack.c.b16 %v1344, %v1340
    %v1385 = vpack.c.b16 %v1349, %v1345
    %v1386 = vpack.c.b16 %v1350, %v1346
    %v1387 = vpack.c.b16 %v1351, %v1347
    %v1388 = vpack.c.b16 %v1352, %v1348
    %v1389 = vpack.c.b16 %v1357, %v1353
    %v1390 = vpack.c.b16 %v1358, %v1354
    %v1391 = vpack.c.b16 %v1359, %v1355
    %v1392 = vpack.c.b16 %v1360, %v1356
    %1425 = vmatpush.bf16.msra.mxu0 %v1389
    %1426 = vmatpush.bf16.msra.mxu0 %v1385
    %1427 = vmatpush.bf16.msra.mxu0 %v1381
    %1428 = vmatpush.bf16.msra.mxu0 %v1377
    %1429 = vmatpush.bf16.msra.mxu0 %v1373
    %1430 = vmatpush.bf16.msra.mxu0 %v1369
    %1431 = vmatpush.bf16.msra.mxu0 %v1365
    %1432 = vmatpush.bf16.msra.mxu0 %v1361
    %1433 = vmatmul.bf16.gmra.mxu0 %v1222
    %v1434 = vpop.f32.mrf.mxu0
    %v1435 = vadd.f32 %v1257, %v1434
    %v1436 = vpop.f32.mrf.mxu0
    %1437 = vdwg.mxu0
    %1438 = vmatpush.bf16.msra.mxu0 %v1390
    %1439 = vmatpush.bf16.msra.mxu0 %v1386
    %1440 = vmatpush.bf16.msra.mxu0 %v1382
    %1441 = vmatpush.bf16.msra.mxu0 %v1378
    %1442 = vmatpush.bf16.msra.mxu0 %v1374
    %1443 = vmatpush.bf16.msra.mxu0 %v1370
    %1444 = vmatpush.bf16.msra.mxu0 %v1366
    %1445 = vmatpush.bf16.msra.mxu0 %v1362
    %1446 = vmatmul.bf16.gmra.mxu0 %v1222
    %v1447 = vpop.f32.mrf.mxu0
    %v1448 = vadd.f32 %v1258, %v1447
    %v1449 = vpop.f32.mrf.mxu0
    %1450 = vdwg.mxu0
    %1451 = vmatpush.bf16.msra.mxu0 %v1391
    %1452 = vmatpush.bf16.msra.mxu0 %v1387
    %1453 = vmatpush.bf16.msra.mxu0 %v1383
    %1454 = vmatpush.bf16.msra.mxu0 %v1379
    %1455 = vmatpush.bf16.msra.mxu0 %v1375
    %1456 = vmatpush.bf16.msra.mxu0 %v1371
    %1457 = vmatpush.bf16.msra.mxu0 %v1367
    %1458 = vmatpush.bf16.msra.mxu0 %v1363
    %1459 = vmatmul.bf16.gmra.mxu0 %v1222
    %v1460 = vpop.f32.mrf.mxu0
    %v1461 = vadd.f32 %v1259, %v1460
    %v1462 = vpop.f32.mrf.mxu0
    %1463 = vdwg.mxu0
    %1464 = vmatpush.bf16.msra.mxu0 %v1392
    %1465 = vmatpush.bf16.msra.mxu0 %v1388
    %1466 = vmatpush.bf16.msra.mxu0 %v1384
    %1467 = vmatpush.bf16.msra.mxu0 %v1380
    %1468 = vmatpush.bf16.msra.mxu0 %v1376
    %1469 = vmatpush.bf16.msra.mxu0 %v1372
    %1470 = vmatpush.bf16.msra.mxu0 %v1368
    %1471 = vmatpush.bf16.msra.mxu0 %v1364
    %1472 = vmatmul.bf16.gmra.mxu0 %v1222
    %v1473 = vpop.f32.mrf.mxu0
    %v1474 = vadd.f32 %v1260, %v1473
    %v1475 = vpop.f32.mrf.mxu0
    %1476 = vdwg.mxu0
    %v1477 = vmax.f32 %v1435, 0.0
    %v1478 = vmax.f32 %v1448, 0.0
    %v1479 = vmax.f32 %v1461, 0.0
    %v1480 = vmax.f32 %v1474, 0.0
    %v1481 = vpack.c.bf16 %v1477, %v1477
    %v1482 = vpack.c.bf16 %v1478, %v1478
    %v1483 = vpack.c.bf16 %v1479, %v1479
    %v1484 = vpack.c.bf16 %v1480, %v1480
    %v1485 = vld [vmem:[%s9] sm:$0xf]
    %v1486 = vld [vmem:[%s9 + $0x4] sm:$0xf]
    %v1487 = vld [vmem:[%s9 + $0x8] sm:$0xf]
    %v1488 = vld [vmem:[%s9 + $0xc] sm:$0xf]
    %v1489 = vld [vmem:[%s9 + $0x10] sm:$0xf]
    %v1490 = vld [vmem:[%s9 + $0x14] sm:$0xf]
    %v1491 = vld [vmem:[%s9 + $0x18] sm:$0xf]
    %v1492 = vld [vmem:[%s9 + $0x1c] sm:$0xf]
    %v1493 = vld [vmem:[%s9 + $0x20] sm:$0xf]
    %v1494 = vld [vmem:[%s9 + $0x24] sm:$0xf]
    %v1495 = vld [vmem:[%s9 + $0x28] sm:$0xf]
    %v1496 = vld [vmem:[%s9 + $0x2c] sm:$0xf]
    %v1497 = vld [vmem:[%s9 + $0x30] sm:$0xf]
    %v1498 = vld [vmem:[%s9 + $0x34] sm:$0xf]
    %v1499 = vld [vmem:[%s9 + $0x38] sm:$0xf]
    %v1500 = vld [vmem:[%s9 + $0x3c] sm:$0xf]
    %v1501 = vld [vmem:[%s9 + $0x40] sm:$0xf]
    %v1502 = vld [vmem:[%s9 + $0x44] sm:$0xf]
    %v1503 = vld [vmem:[%s9 + $0x48] sm:$0xf]
    %v1504 = vld [vmem:[%s9 + $0x4c] sm:$0xf]
    %v1505 = vld [vmem:[%s9 + $0x50] sm:$0xf]
    %v1506 = vld [vmem:[%s9 + $0x54] sm:$0xf]
    %v1507 = vld [vmem:[%s9 + $0x58] sm:$0xf]
    %v1508 = vld [vmem:[%s9 + $0x5c] sm:$0xf]
    %v1509 = vld [vmem:[%s9 + $0x60] sm:$0xf]
    %v1510 = vld [vmem:[%s9 + $0x64] sm:$0xf]
    %v1511 = vld [vmem:[%s9 + $0x68] sm:$0xf]
    %v1512 = vld [vmem:[%s9 + $0x6c] sm:$0xf]
    %v1513 = vld [vmem:[%s9 + $0x70] sm:$0xf]
    %v1514 = vld [vmem:[%s9 + $0x74] sm:$0xf]
    %v1515 = vld [vmem:[%s9 + $0x78] sm:$0xf]
    %v1516 = vld [vmem:[%s9 + $0x7c] sm:$0xf]
    %v1517 = vld [vmem:[%s9 + $0x80] sm:$0xf]
    %v1518 = vld [vmem:[%s9 + $0x84] sm:$0xf]
    %v1519 = vld [vmem:[%s9 + $0x88] sm:$0xf]
    %v1520 = vld [vmem:[%s9 + $0x8c] sm:$0xf]
    %v1521 = vld [vmem:[%s9 + $0x90] sm:$0xf]
    %v1522 = vld [vmem:[%s9 + $0x94] sm:$0xf]
    %v1523 = vld [vmem:[%s9 + $0x98] sm:$0xf]
    %v1524 = vld [vmem:[%s9 + $0x9c] sm:$0xf]
    %v1525 = vld [vmem:[%s9 + $0xa0] sm:$0xf]
    %v1526 = vld [vmem:[%s9 + $0xa4] sm:$0xf]
    %v1527 = vld [vmem:[%s9 + $0xa8] sm:$0xf]
    %v1528 = vld [vmem:[%s9 + $0xac] sm:$0xf]
    %v1529 = vld [vmem:[%s9 + $0xb0] sm:$0xf]
    %v1530 = vld [vmem:[%s9 + $0xb4] sm:$0xf]
    %v1531 = vld [vmem:[%s9 + $0xb8] sm:$0xf]
    %v1532 = vld [vmem:[%s9 + $0xbc] sm:$0xf]
    %v1533 = vld [vmem:[%s9 + $0xc0] sm:$0xf]
    %v1534 = vld [vmem:[%s9 + $0xc4] sm:$0xf]
    %v1535 = vld [vmem:[%s9 + $0xc8] sm:$0xf]
    %v1536 = vld [vmem:[%s9 + $0xcc] sm:$0xf]
    %v1537 = vld [vmem:[%s9 + $0xd0] sm:$0xf]
    %v1538 = vld [vmem:[%s9 + $0xd4] sm:$0xf]
    %v1539 = vld [vmem:[%s9 + $0xd8] sm:$0xf]
    %v1540 = vld [vmem:[%s9 + $0xdc] sm:$0xf]
    %v1541 = vld [vmem:[%s9 + $0xe0] sm:$0xf]
    %v1542 = vld [vmem:[%s9 + $0xe4] sm:$0xf]
    %v1543 = vld [vmem:[%s9 + $0xe8] sm:$0xf]
    %v1544 = vld [vmem:[%s9 + $0xec] sm:$0xf]
    %v1545 = vld [vmem:[%s9 + $0xf0] sm:$0xf]
    %v1546 = vld [vmem:[%s9 + $0xf4] sm:$0xf]
    %v1547 = vld [vmem:[%s9 + $0xf8] sm:$0x3]
    %v1548 = vld [vmem:[%s10] sm:$0x1]
    %v1550 = vperm.slane %v1548, 0
    %v1615 = vunpack.c.l.b16 %v1485
    %v1616 = vunpack.c.l.b16 %v1486
    %v1617 = vunpack.c.l.b16 %v1487
    %v1618 = vunpack.c.l.b16 %v1488
    %v1619 = vunpack.c.l.b16 %v1489
    %v1620 = vunpack.c.l.b16 %v1490
    %v1621 = vunpack.c.l.b16 %v1491
    %v1622 = vunpack.c.l.b16 %v1492
    %v1623 = vunpack.c.l.b16 %v1493
    %v1624 = vunpack.c.l.b16 %v1494
    %v1625 = vunpack.c.l.b16 %v1495
    %v1626 = vunpack.c.l.b16 %v1496
    %v1627 = vunpack.c.l.b16 %v1497
    %v1628 = vunpack.c.l.b16 %v1498
    %v1629 = vunpack.c.l.b16 %v1499
    %v1630 = vunpack.c.l.b16 %v1500
    %v1631 = vunpack.c.l.b16 %v1501
    %v1632 = vunpack.c.l.b16 %v1502
    %v1633 = vunpack.c.l.b16 %v1503
    %v1634 = vunpack.c.l.b16 %v1504
    %v1635 = vunpack.c.l.b16 %v1505
    %v1636 = vunpack.c.l.b16 %v1506
    %v1637 = vunpack.c.l.b16 %v1507
    %v1638 = vunpack.c.l.b16 %v1508
    %v1639 = vunpack.c.l.b16 %v1509
    %v1640 = vunpack.c.l.b16 %v1510
    %v1641 = vunpack.c.l.b16 %v1511
    %v1642 = vunpack.c.l.b16 %v1512
    %v1643 = vunpack.c.l.b16 %v1513
    %v1644 = vunpack.c.l.b16 %v1514
    %v1645 = vunpack.c.l.b16 %v1515
    %v1646 = vunpack.c.l.b16 %v1516
    %v1647 = vunpack.c.l.b16 %v1517
    %v1648 = vunpack.c.l.b16 %v1518
    %v1649 = vunpack.c.l.b16 %v1519
    %v1650 = vunpack.c.l.b16 %v1520
    %v1651 = vunpack.c.l.b16 %v1521
    %v1652 = vunpack.c.l.b16 %v1522
    %v1653 = vunpack.c.l.b16 %v1523
    %v1654 = vunpack.c.l.b16 %v1524
    %v1655 = vunpack.c.l.b16 %v1525
    %v1656 = vunpack.c.l.b16 %v1526
    %v1657 = vunpack.c.l.b16 %v1527
    %v1658 = vunpack.c.l.b16 %v1528
    %v1659 = vunpack.c.l.b16 %v1529
    %v1660 = vunpack.c.l.b16 %v1530
    %v1661 = vunpack.c.l.b16 %v1531
    %v1662 = vunpack.c.l.b16 %v1532
    %v1663 = vunpack.c.l.b16 %v1533
    %v1664 = vunpack.c.l.b16 %v1534
    %v1665 = vunpack.c.l.b16 %v1535
    %v1666 = vunpack.c.l.b16 %v1536
    %v1667 = vunpack.c.l.b16 %v1537
    %v1668 = vunpack.c.l.b16 %v1538
    %v1669 = vunpack.c.l.b16 %v1539
    %v1670 = vunpack.c.l.b16 %v1540
    %v1671 = vunpack.c.l.b16 %v1541
    %v1672 = vunpack.c.l.b16 %v1542
    %v1673 = vunpack.c.l.b16 %v1543
    %v1674 = vunpack.c.l.b16 %v1544
    %v1675 = vunpack.c.l.b16 %v1545
    %v1676 = vunpack.c.l.b16 %v1546
    %v1677 = vunpack.c.l.b16 %v1547
    %v1678 = vpack.c.b16 %v1616, %v1615
    %v1679 = vpack.c.b16 %v1618, %v1617
    %v1680 = vpack.c.b16 %v1620, %v1619
    %v1681 = vpack.c.b16 %v1622, %v1621
    %v1682 = vpack.c.b16 %v1624, %v1623
    %v1683 = vpack.c.b16 %v1626, %v1625
    %v1684 = vpack.c.b16 %v1628, %v1627
    %v1685 = vpack.c.b16 %v1630, %v1629
    %v1686 = vpack.c.b16 %v1632, %v1631
    %v1687 = vpack.c.b16 %v1634, %v1633
    %v1688 = vpack.c.b16 %v1636, %v1635
    %v1689 = vpack.c.b16 %v1638, %v1637
    %v1690 = vpack.c.b16 %v1640, %v1639
    %v1691 = vpack.c.b16 %v1642, %v1641
    %v1692 = vpack.c.b16 %v1644, %v1643
    %v1693 = vpack.c.b16 %v1646, %v1645
    %v1694 = vpack.c.b16 %v1648, %v1647
    %v1695 = vpack.c.b16 %v1650, %v1649
    %v1696 = vpack.c.b16 %v1652, %v1651
    %v1697 = vpack.c.b16 %v1654, %v1653
    %v1698 = vpack.c.b16 %v1656, %v1655
    %v1699 = vpack.c.b16 %v1658, %v1657
    %v1700 = vpack.c.b16 %v1660, %v1659
    %v1701 = vpack.c.b16 %v1662, %v1661
    %v1702 = vpack.c.b16 %v1664, %v1663
    %v1703 = vpack.c.b16 %v1666, %v1665
    %v1704 = vpack.c.b16 %v1668, %v1667
    %v1705 = vpack.c.b16 %v1670, %v1669
    %v1706 = vpack.c.b16 %v1672, %v1671
    %v1707 = vpack.c.b16 %v1674, %v1673
    %v1708 = vpack.c.b16 %v1676, %v1675
    %v1709 = vpack.c.b16 %v1677, %v1677
    %vm1741 = vcmask 949248
    %v1743 = vsel %vm1741, %v1484, 0
    %vm1745 = vcmask 1041408
    %v1747 = vsel %vm1745, %v1709, 0
    %1749 = vmatpush.bf16.msra.mxu0 %v1685
    %1750 = vmatpush.bf16.msra.mxu0 %v1684
    %1751 = vmatpush.bf16.msra.mxu0 %v1683
    %1752 = vmatpush.bf16.msra.mxu0 %v1682
    %1753 = vmatpush.bf16.msra.mxu0 %v1681
    %1754 = vmatpush.bf16.msra.mxu0 %v1680
    %1755 = vmatpush.bf16.msra.mxu0 %v1679
    %1756 = vmatpush.bf16.msra.mxu0 %v1678
    %1757 = vmatmul.bf16.gmra.mxu0 %v1481
    %v1758 = vpop.f32.mrf.mxu0
    %v1759 = vadd.f32 %v1550, %v1758
    %v1760 = vpop.f32.mrf.mxu0
    %1761 = vdwg.mxu0
    %1762 = vmatpush.bf16.msra.mxu0 %v1693
    %1763 = vmatpush.bf16.msra.mxu0 %v1692
    %1764 = vmatpush.bf16.msra.mxu0 %v1691
    %1765 = vmatpush.bf16.msra.mxu0 %v1690
    %1766 = vmatpush.bf16.msra.mxu0 %v1689
    %1767 = vmatpush.bf16.msra.mxu0 %v1688
    %1768 = vmatpush.bf16.msra.mxu0 %v1687
    %1769 = vmatpush.bf16.msra.mxu0 %v1686
    %1770 = vmatmul.bf16.gmra.mxu0 %v1482
    %v1771 = vpop.f32.mrf.mxu0
    %v1772 = vadd.f32 %v1759, %v1771
    %v1773 = vpop.f32.mrf.mxu0
    %1774 = vdwg.mxu0
    %1775 = vmatpush.bf16.msra.mxu0 %v1701
    %1776 = vmatpush.bf16.msra.mxu0 %v1700
    %1777 = vmatpush.bf16.msra.mxu0 %v1699
    %1778 = vmatpush.bf16.msra.mxu0 %v1698
    %1779 = vmatpush.bf16.msra.mxu0 %v1697
    %1780 = vmatpush.bf16.msra.mxu0 %v1696
    %1781 = vmatpush.bf16.msra.mxu0 %v1695
    %1782 = vmatpush.bf16.msra.mxu0 %v1694
    %1783 = vmatmul.bf16.gmra.mxu0 %v1483
    %v1784 = vpop.f32.mrf.mxu0
    %v1785 = vadd.f32 %v1772, %v1784
    %v1786 = vpop.f32.mrf.mxu0
    %1787 = vdwg.mxu0
    %1788 = vmatpush.bf16.msra.mxu0 %v1747
    %1789 = vmatpush.bf16.msra.mxu0 %v1708
    %1790 = vmatpush.bf16.msra.mxu0 %v1707
    %1791 = vmatpush.bf16.msra.mxu0 %v1706
    %1792 = vmatpush.bf16.msra.mxu0 %v1705
    %1793 = vmatpush.bf16.msra.mxu0 %v1704
    %1794 = vmatpush.bf16.msra.mxu0 %v1703
    %1795 = vmatpush.bf16.msra.mxu0 %v1702
    %1796 = vmatmul.bf16.gmra.mxu0 %v1743
    %v1797 = vpop.f32.mrf.mxu0
    %v1798 = vadd.f32 %v1785, %v1797
    %v1799 = vpop.f32.mrf.mxu0
    %1800 = vdwg.mxu0
    %v1801 = vmax.f32 %v1798, 0.0
    %v1802 = vpack.c.bf16 %v1801, %v1801
    %v1803 = vld [vmem:[%s11] sm:$0xf]
    %v1804 = vld [vmem:[%s11 + $0x4] sm:$0xf]
    %v1805 = vld [vmem:[%s11 + $0x8] sm:$0xf]
    %v1806 = vld [vmem:[%s11 + $0xc] sm:$0xf]
    %v1807 = vld [vmem:[%s11 + $0x10] sm:$0xf]
    %v1808 = vld [vmem:[%s11 + $0x14] sm:$0xf]
    %v1809 = vld [vmem:[%s11 + $0x18] sm:$0xf]
    %v1810 = vld [vmem:[%s11 + $0x1c] sm:$0xf]
    %v1811 = vld [vmem:[%s11 + $0x20] sm:$0xf]
    %v1812 = vld [vmem:[%s11 + $0x24] sm:$0xf]
    %v1813 = vld [vmem:[%s11 + $0x28] sm:$0xf]
    %v1814 = vld [vmem:[%s11 + $0x2c] sm:$0xf]
    %v1815 = vld [vmem:[%s11 + $0x30] sm:$0x3]
    %v1816 = vld [vmem:[%s12] sm:$0x1]
    %v1818 = vperm.slane %v1816, 0
    %v1833 = vunpack.c.l.b16 %v1803
    %v1834 = vunpack.c.l.b16 %v1804
    %v1835 = vunpack.c.l.b16 %v1805
    %v1836 = vunpack.c.l.b16 %v1806
    %v1837 = vunpack.c.l.b16 %v1807
    %v1838 = vunpack.c.l.b16 %v1808
    %v1839 = vunpack.c.l.b16 %v1809
    %v1840 = vunpack.c.l.b16 %v1810
    %v1841 = vunpack.c.l.b16 %v1811
    %v1842 = vunpack.c.l.b16 %v1812
    %v1843 = vunpack.c.l.b16 %v1813
    %v1844 = vunpack.c.l.b16 %v1814
    %v1845 = vunpack.c.l.b16 %v1815
    %v1846 = vpack.c.b16 %v1834, %v1833
    %v1847 = vpack.c.b16 %v1836, %v1835
    %v1848 = vpack.c.b16 %v1838, %v1837
    %v1849 = vpack.c.b16 %v1840, %v1839
    %v1850 = vpack.c.b16 %v1842, %v1841
    %v1851 = vpack.c.b16 %v1844, %v1843
    %v1852 = vpack.c.b16 %v1845, %v1845
    %vm1859 = vcmask 818176
    %v1861 = vsel %vm1859, %v1802, 0
    %v1864 = vsel %vm1745, %v1852, 0
    %1866 = vmatpush.bf16.msra.mxu0 0
    %1867 = vmatpush.bf16.msra.mxu0 %v1864
    %1868 = vmatpush.bf16.msra.mxu0 %v1851
    %1869 = vmatpush.bf16.msra.mxu0 %v1850
    %1870 = vmatpush.bf16.msra.mxu0 %v1849
    %1871 = vmatpush.bf16.msra.mxu0 %v1848
    %1872 = vmatpush.bf16.msra.mxu0 %v1847
    %1873 = vmatpush.bf16.msra.mxu0 %v1846
    %1874 = vmatmul.bf16.gmra.mxu0 %v1861
    %v1875 = vpop.f32.mrf.mxu0
    %v1876 = vadd.f32 %v1818, %v1875
    %v1877 = vpop.f32.mrf.mxu0
    %1878 = vdwg.mxu0
    %vm1879 = vcmask 17408
    %1880 = vst.msk [vmem:[#allocation7] sm:$0x3] %vm1879, %v1876
    // Predicated region
    $region54: #{furfaro_forward.1} parent=1 // pred_check
      _
    $region55: #{furfaro_forward.1} parent=1 // pred_check_branch
      %1882 = sbr.rel (0) target = $region57
    $region56: #{furfaro_forward.1} parent=1 // pred_region
      %1884 = vsyncadd [#allocation8], 0
      %s1886 = sshll.u32 [#allocation7], 4
      %s1887 = int_to_ptr.vmem [resolvable:$true] %s1886
      %s1888 = sshll.u32 %s13, 4
      %s1889 = int_to_ptr.hbm [resolvable:$true] %s1888
      %1891 = dma.vmem_to_hbm [thread:$0]  %s1887, 32, %s1889, [#allocation8]
    $region57: #{furfaro_forward.1} parent=1 // pred_fallthru
      _
    // Predicated region
    $region58: #{furfaro_forward.1} parent=1 // pred_check
      _
    $region59: #{furfaro_forward.1} parent=1 // pred_check_branch
      %1893 = sbr.rel (0) target = $region61
    $region60: #{furfaro_forward.1} parent=1 // pred_region
      %1895 = dma.done [#allocation8], 32
    $region61: #{furfaro_forward.1} parent=1 // pred_fallthru
      _
    %1896 = vsyncpa [#allocation8], 1

</llo_original>
